<compile_context>
chip_gen: v5e
topology: v5e:2x2
jax: 0.10.0
libtpu: 0.0.40
codegen_flags: <defaults>
</compile_context>

<pallas_src>
import numpy as np
import jax
import jax.numpy as jnp
from jax import lax
from jax.experimental import pallas as pl
from jax.experimental.pallas import tpu as pltpu

_HALO = 128  # lane-aligned halo width; must cover n_off - 1 tap spill


def _round_up(x, m):
    return ((x + m - 1) // m) * m


def _make_kernel(n_off, lt, stride, cout, cout_pad, precision):
    """Kernel body for one (batch-pair, time-tile) grid step."""
    c2 = 2 * cout_pad
    n_chunks = lt // 128

    def im2col(xc_ref, xh_ref):
        # 2 complex halves x n_off tap offsets stacked on sublanes.
        pieces = []
        for h in range(2):
            win = jnp.concatenate([xc_ref[h], xh_ref[h]], axis=-1)  # (Cin_p, lt+128)
            for o in range(n_off):
                pieces.append(win[:, o:o + lt])
        return jnp.concatenate(pieces, axis=0)                      # (2*n_off*Cin_p, lt)

    if stride == 1:
        # No phase interleave needed: output time == phase position.
        def kernel(xc_ref, xh_ref, w_ref, b_ref, out_ref):
            x_stack = im2col(xc_ref, xh_ref)
            res = jnp.dot(w_ref[...], x_stack,
                          preferred_element_type=jnp.float32,
                          precision=precision)                      # (2*Cout_p, lt)
            acc = res + b_ref[...]
            out_ref[0, :, :] = acc[:cout, :]
            out_ref[1, :, :] = acc[cout_pad:cout_pad + cout, :]
        return kernel

    def kernel(xc_ref, xh_ref, w_ref, p_ref, b_ref, out_ref):
        # xc_ref : (2, Cin_p, lt)          current time block (lane-dense)
        # xh_ref : (2, Cin_p, 128)         halo block (next 128 columns)
        # w_ref  : (s*2*Cout_p, 2*n_off*Cin_p)  fused polyphase/complex weight
        # p_ref  : (s, 128, s*128)         0/1 chunked phase-interleave mats
        # b_ref  : (2*Cout_p, 1)           fused bias [br - bi ; br + bi]
        # out_ref: (2, Cout, s*lt)         output tile, time on lanes
        x_stack = im2col(xc_ref, xh_ref)

        # Single MXU matmul: every (phase, real/imag-out, channel) row at once.
        res = jnp.dot(w_ref[...], x_stack,
                      preferred_element_type=jnp.float32,
                      precision=precision)                          # (s*c2, lt)

        bias = b_ref[...]                                           # (c2, 1)
        # Chunked interleave: 128 phase positions -> s*128 output times per
        # chunk, so interleave FLOPs are linear (not quadratic) in lt.
        for c in range(n_chunks):                                   # static, unrolled
            lo = c * 128
            acc = jnp.dot(res[0:c2, lo:lo + 128], p_ref[0],
                          preferred_element_type=jnp.float32,
                          precision=precision)
            for r in range(1, stride):
                acc = acc + jnp.dot(res[r * c2:(r + 1) * c2, lo:lo + 128],
                                    p_ref[r],
                                    preferred_element_type=jnp.float32,
                                    precision=precision)
            acc = acc + bias                                        # (c2, s*128)
            t0 = c * stride * 128
            out_ref[0, :, pl.ds(t0, stride * 128)] = acc[:cout, :]
            out_ref[1, :, pl.ds(t0, stride * 128)] = acc[cout_pad:cout_pad + cout, :]

    return kernel


def complex_conv_transpose1d(x, w_real, w_imag, b_real, b_imag,
                             stride=2, padding=3, time_tile=512,
                             compute_dtype=jnp.bfloat16):
    """x: (B, Cin, L) NCL.  w_*: (Cin, Cout, K).  b_*: (Cout,).
    Returns (B, Cout, Lout) f32 with Lout = (L-1)*stride - 2*padding + K."""
    B, Cin, L = x.shape
    _, Cout, K = w_real.shape
    s = int(stride)
    assert B % 2 == 0, "complex_axis=0 requires an even batch"
    # The polyphase index math below silently relies on padding <= K-1.
    assert padding <= K - 1, "padding > K-1 not supported"
    Lout = (L - 1) * s - 2 * padding + K

    cin_p = _round_up(Cin, 8)
    cout_p = _round_up(Cout, 8)
    f32 = jnp.float32
    strict = jnp.dtype(compute_dtype) == jnp.dtype(jnp.float32)
    precision = lax.Precision.HIGHEST if strict else lax.Precision.DEFAULT

    # ---- static polyphase bookkeeping (host-side ints) ----------------------
    PL = (K - 1 - padding) // s                 # left zero-pad (input samples)
    n_off = PL + (s - 1 + padding) // s + 1     # tap offsets per phase
    assert n_off - 1 <= _HALO
    k_idx = np.zeros((s, n_off), np.int64)
    valid = np.zeros((s, n_off), np.float32)
    for r in range(s):
        for o in range(n_off):
            k = s * (PL - o) + r + padding
            if 0 <= k < K:
                k_idx[r, o] = k
                valid[r, o] = 1.0

    # ---- time tiling: lt is always a multiple of 128 (lane-dense stores) ----
    L_time = max(L, -(-Lout // s))              # phase positions to produce
    n_t = max(1, -(-L_time // time_tile))
    lt = 128 * (-(-L_time // (128 * n_t)))
    Tp = n_t * lt + _HALO                       # padded input time length

    # ---- fused weight: rows (phase, real/imag-out, co), cols (half, off, ci)
    wr = jnp.pad(w_real.astype(f32), ((0, cin_p - Cin), (0, cout_p - Cout), (0, 0)))
    wi = jnp.pad(w_imag.astype(f32), ((0, cin_p - Cin), (0, cout_p - Cout), (0, 0)))
    valid_j = jnp.asarray(valid)

    def taps(w):                                # (Cin_p,Cout_p,K) -> (s,n_off,Cin_p,Cout_p)
        g = w[:, :, k_idx.reshape(-1)]
        g = jnp.transpose(g, (2, 0, 1)).reshape(s, n_off, cin_p, cout_p)
        return g * valid_j[:, :, None, None]

    tr = jnp.transpose(taps(wr), (0, 3, 1, 2))  # (s,Cout_p,n_off,Cin_p)
    ti = jnp.transpose(taps(wi), (0, 3, 1, 2))
    rows_real = jnp.stack([tr, -ti], axis=2)    # real out = Wr*xA - Wi*xB
    rows_imag = jnp.stack([ti, tr], axis=2)     # imag out = Wi*xA + Wr*xB
    w_fused = jnp.stack([rows_real, rows_imag], axis=1)   # (s,2,Cout_p,2,n_off,Cin_p)
    w_fused = w_fused.reshape(s * 2 * cout_p, 2 * n_off * cin_p).astype(compute_dtype)

    br = jnp.pad(b_real.astype(f32), (0, cout_p - Cout))
    bi = jnp.pad(b_imag.astype(f32), (0, cout_p - Cout))
    b_fused = jnp.concatenate([br - bi, br + bi]).reshape(2 * cout_p, 1)

    # ---- input: (B,Cin,L) -> (2, B/2, Cin_p, Tp), zero-padded ---------------
    Bh = B // 2
    xr = x.astype(compute_dtype).reshape(2, Bh, Cin, L)
    # TODO(synk): the zero-pad below is one extra HBM pass over x; folding it
    # into a manual halo DMA (memory_space=pl.ANY) would remove it.
    xp = jnp.pad(xr, ((0, 0), (0, 0), (0, cin_p - Cin), (PL, Tp - PL - L)))

    # ---- VMEM budget (double-buffered blocks + in-kernel temps) -------------
    cdtb = jnp.dtype(compute_dtype).itemsize
    ws = 0
    ws += 2 * (2 * cin_p * lt * cdtb)                           # x_cur block
    ws += 2 * (2 * cin_p * _HALO * cdtb)                        # x_halo block
    ws += 2 * (s * 2 * cout_p * 2 * n_off * cin_p * cdtb)       # w_fused
    if s > 1:
        ws += 2 * (s * 128 * s * 128 * 4)                       # p_mat
    ws += 2 * (2 * cout_p * 4)                                  # bias
    ws += 2 * (2 * Cout * s * lt * 4)                           # out block
    ws += 2 * n_off * cin_p * lt * cdtb                         # x_stack temp
    ws += 2 * cin_p * (lt + _HALO) * cdtb                       # im2col windows
    ws += s * 2 * cout_p * lt * 4                               # res temp
    vmem_limit = min(max(int(ws * 1.25) + (4 << 20), 32 << 20), 128 << 20)

    # ---- specs ---------------------------------------------------------------
    n128 = lt // 128
    x_cur_spec = pl.BlockSpec((2, None, cin_p, lt), lambda b, i: (0, b, 0, i))
    x_halo_spec = pl.BlockSpec((2, None, cin_p, _HALO),
                               lambda b, i: (0, b, 0, (i + 1) * n128))
    in_specs = [x_cur_spec, x_halo_spec,
                pl.BlockSpec((s * 2 * cout_p, 2 * n_off * cin_p), lambda b, i: (0, 0))]
    args = [xp, xp, w_fused]
    if s > 1:
        p_np = np.zeros((s, 128, s * 128), np.float32)
        m = np.arange(128)
        for r in range(s):
            p_np[r, m, s * m + r] = 1.0
        in_specs.append(pl.BlockSpec((s, 128, s * 128), lambda b, i: (0, 0, 0)))
        args.append(jnp.asarray(p_np))
    in_specs.append(pl.BlockSpec((2 * cout_p, 1), lambda b, i: (0, 0)))
    args.append(b_fused)

    kernel = _make_kernel(n_off, lt, s, Cout, cout_p, precision)
    out_k = pl.pallas_call(
        kernel,
        out_shape=jax.ShapeDtypeStruct((2, Bh, Cout, n_t * s * lt), jnp.float32),
        grid=(Bh, n_t),
        in_specs=in_specs,
        out_specs=pl.BlockSpec((2, None, Cout, s * lt), lambda b, i: (0, b, 0, i)),
        compiler_params=pltpu.CompilerParams(
            dimension_semantics=("parallel", "arbitrary"),
            vmem_limit_bytes=vmem_limit),
    )(*args)

    out = out_k.reshape(B, Cout, n_t * s * lt)
    return out[:, :, :Lout]


# ---------------- reference (numpy, straight from conv-transpose def) --------
def _convT1d_ref(x, w, b, stride, padding):
    B, Cin, L = x.shape
    _, Cout, K = w.shape
    Lout = (L - 1) * stride - 2 * padding + K
    out = np.zeros((B, Cout, Lout), np.float64)
    for l in range(L):
        for k in range(K):
            t = l * stride - padding + k
            if 0 <= t < Lout:
                out[:, :, t] += np.einsum('bc,cd->bd', x[:, :, l], w[:, :, k])
    return out + b[None, :, None]


def _module_ref(x, wr, wi, br, bi, stride, padding):
    r = _convT1d_ref(x, wr, br, stride, padding)
    i = _convT1d_ref(x, wi, bi, stride, padding)
    half = x.shape[0] // 2
    real = r[:half] - i[half:]
    imag = i[:half] + r[half:]
    return np.concatenate([real, imag], axis=0)


if __name__ == "__main__":
    key = jax.random.PRNGKey(0)
    ks = jax.random.split(key, 5)

    # --- test 1: module defaults (K=8, s=2, p=3); multi time-tile so the halo
    #             path carries real data across the tile boundary -------------
    B, Cin, Cout, L, K = 4, 4, 4, 200, 8
    stride, padding = 2, 3
    x = jax.random.normal(ks[0], (B, Cin, L), jnp.float32)
    w_real = 0.05 * jax.random.normal(ks[1], (Cin, Cout, K), jnp.float32)
    w_imag = 0.05 * jax.random.normal(ks[2], (Cin, Cout, K), jnp.float32)
    b_real = 0.05 * jax.random.normal(ks[3], (Cout,), jnp.float32)
    b_imag = 0.05 * jax.random.normal(ks[4], (Cout,), jnp.float32)

    ref = _module_ref(np.asarray(x, np.float64), np.asarray(w_real, np.float64),
                      np.asarray(w_imag, np.float64), np.asarray(b_real, np.float64),
                      np.asarray(b_imag, np.float64), stride, padding)

    out = jax.block_until_ready(complex_conv_transpose1d(
        x, w_real, w_imag, b_real, b_imag, stride=stride, padding=padding,
        time_tile=128, compute_dtype=jnp.float32))
    assert out.shape == ref.shape, (out.shape, ref.shape)
    np.testing.assert_allclose(np.asarray(out), ref, atol=1e-4, rtol=1e-4)

    # --- test 2: bf16 streaming path (f32 accumulation), same config ---------
    out_bf = jax.block_until_ready(complex_conv_transpose1d(
        x, w_real, w_imag, b_real, b_imag, stride=stride, padding=padding,
        time_tile=128, compute_dtype=jnp.bfloat16))
    np.testing.assert_allclose(np.asarray(out_bf), ref, atol=2e-2, rtol=2e-2)

    # --- test 3: stride=1 fast path, non-multiple-of-8 channels --------------
    B2, Cin2, Cout2, L2, K2 = 2, 3, 5, 16, 5
    x2 = jax.random.normal(ks[0], (B2, Cin2, L2), jnp.float32)
    wr2 = 0.05 * jax.random.normal(ks[1], (Cin2, Cout2, K2), jnp.float32)
    wi2 = 0.05 * jax.random.normal(ks[2], (Cin2, Cout2, K2), jnp.float32)
    br2 = 0.05 * jax.random.normal(ks[3], (Cout2,), jnp.float32)
    bi2 = 0.05 * jax.random.normal(ks[4], (Cout2,), jnp.float32)
    ref2 = _module_ref(np.asarray(x2, np.float64), np.asarray(wr2, np.float64),
                       np.asarray(wi2, np.float64), np.asarray(br2, np.float64),
                       np.asarray(bi2, np.float64), 1, 2)
    out2 = jax.block_until_ready(complex_conv_transpose1d(
        x2, wr2, wi2, br2, bi2, stride=1, padding=2, compute_dtype=jnp.float32))
    np.testing.assert_allclose(np.asarray(out2), ref2, atol=1e-4, rtol=1e-4)

    print("KERNEL_OK")
</pallas_src>

<mosaic_0001>
module attributes {stable_mosaic.version = 11 : i64} {
  func.func @kernel(%arg0: i32, %arg1: i32, %arg2: memref<2x1x8x128xf32, #tpu.memory_space<vmem>>, %arg3: memref<2x1x8x128xf32, #tpu.memory_space<vmem>>, %arg4: memref<32x80xf32, #tpu.memory_space<vmem>>, %arg5: memref<2x128x256xf32, #tpu.memory_space<vmem>>, %arg6: memref<16x1xf32, #tpu.memory_space<vmem>>, %arg7: memref<2x1x4x256xf32, #tpu.memory_space<vmem>>) attributes {dimension_semantics = [#tpu.dimension_semantics<parallel>, #tpu.dimension_semantics<arbitrary>], iteration_bounds = array<i64: 2, 2>, scalar_prefetch = 0 : i64, scratch_operands = 0 : i64, tpu.core_type = #tpu.core_type<tc>, window_params = [{transform_indices = @transform_0, window_bounds = array<i64: 2, 1, 8, 128>}, {transform_indices = @transform_1, window_bounds = array<i64: 2, 1, 8, 128>}, {pipeline_mode = #tpu.pipeline_mode<synchronous>, transform_indices = @transform_2, window_bounds = array<i64: 32, 80>}, {pipeline_mode = #tpu.pipeline_mode<synchronous>, transform_indices = @transform_3, window_bounds = array<i64: 2, 128, 256>}, {pipeline_mode = #tpu.pipeline_mode<synchronous>, transform_indices = @transform_4, window_bounds = array<i64: 16, 1>}, {transform_indices = @transform_5, window_bounds = array<i64: 2, 1, 4, 256>}]} {
    %c0 = arith.constant 0 : index
    %c0_0 = arith.constant 0 : index
    %c0_1 = arith.constant 0 : index
    %c0_2 = arith.constant 0 : index
    %0 = vector.load %arg2[%c0, %c0_0, %c0_1, %c0_2] : memref<2x1x8x128xf32, #tpu.memory_space<vmem>>, vector<1x1x8x128xf32>
    %1 = vector.shape_cast %0 : vector<1x1x8x128xf32> to vector<8x128xf32>
    %c0_3 = arith.constant 0 : index
    %c0_4 = arith.constant 0 : index
    %c0_5 = arith.constant 0 : index
    %c0_6 = arith.constant 0 : index
    %2 = vector.load %arg3[%c0_3, %c0_4, %c0_5, %c0_6] : memref<2x1x8x128xf32, #tpu.memory_space<vmem>>, vector<1x1x8x128xf32>
    %3 = vector.shape_cast %2 : vector<1x1x8x128xf32> to vector<8x128xf32>
    %4 = tpu.concatenate %1, %3 in 1 : vector<8x128xf32>, vector<8x128xf32> -> vector<8x256xf32>
    %5 = vector.extract_strided_slice %4 {offsets = [0, 0], sizes = [8, 128], strides = [1, 1]} : vector<8x256xf32> to vector<8x128xf32>
    %6 = vector.extract_strided_slice %4 {offsets = [0, 1], sizes = [8, 128], strides = [1, 1]} : vector<8x256xf32> to vector<8x128xf32>
    %7 = vector.extract_strided_slice %4 {offsets = [0, 2], sizes = [8, 128], strides = [1, 1]} : vector<8x256xf32> to vector<8x128xf32>
    %8 = vector.extract_strided_slice %4 {offsets = [0, 3], sizes = [8, 128], strides = [1, 1]} : vector<8x256xf32> to vector<8x128xf32>
    %9 = vector.extract_strided_slice %4 {offsets = [0, 4], sizes = [8, 128], strides = [1, 1]} : vector<8x256xf32> to vector<8x128xf32>
    %c1 = arith.constant 1 : index
    %c0_7 = arith.constant 0 : index
    %c0_8 = arith.constant 0 : index
    %c0_9 = arith.constant 0 : index
    %10 = vector.load %arg2[%c1, %c0_7, %c0_8, %c0_9] : memref<2x1x8x128xf32, #tpu.memory_space<vmem>>, vector<1x1x8x128xf32>
    %11 = vector.shape_cast %10 : vector<1x1x8x128xf32> to vector<8x128xf32>
    %c1_10 = arith.constant 1 : index
    %c0_11 = arith.constant 0 : index
    %c0_12 = arith.constant 0 : index
    %c0_13 = arith.constant 0 : index
    %12 = vector.load %arg3[%c1_10, %c0_11, %c0_12, %c0_13] : memref<2x1x8x128xf32, #tpu.memory_space<vmem>>, vector<1x1x8x128xf32>
    %13 = vector.shape_cast %12 : vector<1x1x8x128xf32> to vector<8x128xf32>
    %14 = tpu.concatenate %11, %13 in 1 : vector<8x128xf32>, vector<8x128xf32> -> vector<8x256xf32>
    %15 = vector.extract_strided_slice %14 {offsets = [0, 0], sizes = [8, 128], strides = [1, 1]} : vector<8x256xf32> to vector<8x128xf32>
    %16 = vector.extract_strided_slice %14 {offsets = [0, 1], sizes = [8, 128], strides = [1, 1]} : vector<8x256xf32> to vector<8x128xf32>
    %17 = vector.extract_strided_slice %14 {offsets = [0, 2], sizes = [8, 128], strides = [1, 1]} : vector<8x256xf32> to vector<8x128xf32>
    %18 = vector.extract_strided_slice %14 {offsets = [0, 3], sizes = [8, 128], strides = [1, 1]} : vector<8x256xf32> to vector<8x128xf32>
    %19 = vector.extract_strided_slice %14 {offsets = [0, 4], sizes = [8, 128], strides = [1, 1]} : vector<8x256xf32> to vector<8x128xf32>
    %20 = tpu.concatenate %5, %6, %7, %8, %9, %15, %16, %17, %18, %19 in 0 : vector<8x128xf32>, vector<8x128xf32>, vector<8x128xf32>, vector<8x128xf32>, vector<8x128xf32>, vector<8x128xf32>, vector<8x128xf32>, vector<8x128xf32>, vector<8x128xf32>, vector<8x128xf32> -> vector<80x128xf32>
    %c0_14 = arith.constant 0 : index
    %c0_15 = arith.constant 0 : index
    %21 = vector.load %arg4[%c0_14, %c0_15] : memref<32x80xf32, #tpu.memory_space<vmem>>, vector<32x80xf32>
    %cst = arith.constant dense<0.000000e+00> : vector<32x128xf32>
    %22 = tpu.matmul %21, %20, %cst {dimension_numbers = #tpu.dot_dimension_numbers<[1], [0], [0], [1], [0, 0, 1, 1], [], []>, precision = #tpu.contract_precision<fp32>} : vector<32x80xf32>, vector<80x128xf32>, vector<32x128xf32> -> vector<32x128xf32>
    %c0_16 = arith.constant 0 : index
    %c0_17 = arith.constant 0 : index
    %23 = vector.load %arg6[%c0_16, %c0_17] : memref<16x1xf32, #tpu.memory_space<vmem>>, vector<16x1xf32>
    %24 = vector.extract_strided_slice %22 {offsets = [0, 0], sizes = [16, 128], strides = [1, 1]} : vector<32x128xf32> to vector<16x128xf32>
    %c0_18 = arith.constant 0 : index
    %c0_19 = arith.constant 0 : index
    %c0_20 = arith.constant 0 : index
    %25 = vector.load %arg5[%c0_18, %c0_19, %c0_20] : memref<2x128x256xf32, #tpu.memory_space<vmem>>, vector<1x128x256xf32>
    %26 = vector.shape_cast %25 : vector<1x128x256xf32> to vector<128x256xf32>
    %cst_21 = arith.constant dense<0.000000e+00> : vector<16x256xf32>
    %27 = tpu.matmul %24, %26, %cst_21 {dimension_numbers = #tpu.dot_dimension_numbers<[1], [0], [0], [1], [0, 0, 1, 1], [], []>, precision = #tpu.contract_precision<fp32>} : vector<16x128xf32>, vector<128x256xf32>, vector<16x256xf32> -> vector<16x256xf32>
    %28 = vector.extract_strided_slice %22 {offsets = [16, 0], sizes = [16, 128], strides = [1, 1]} : vector<32x128xf32> to vector<16x128xf32>
    %c1_22 = arith.constant 1 : index
    %c0_23 = arith.constant 0 : index
    %c0_24 = arith.constant 0 : index
    %29 = vector.load %arg5[%c1_22, %c0_23, %c0_24] : memref<2x128x256xf32, #tpu.memory_space<vmem>>, vector<1x128x256xf32>
    %30 = vector.shape_cast %29 : vector<1x128x256xf32> to vector<128x256xf32>
    %cst_25 = arith.constant dense<0.000000e+00> : vector<16x256xf32>
    %31 = tpu.matmul %28, %30, %cst_25 {dimension_numbers = #tpu.dot_dimension_numbers<[1], [0], [0], [1], [0, 0, 1, 1], [], []>, precision = #tpu.contract_precision<fp32>} : vector<16x128xf32>, vector<128x256xf32>, vector<16x256xf32> -> vector<16x256xf32>
    %32 = arith.addf %27, %31 : vector<16x256xf32>
    %33 = vector.broadcast %23 : vector<16x1xf32> to vector<16x256xf32>
    %34 = arith.addf %32, %33 : vector<16x256xf32>
    %35 = vector.extract_strided_slice %34 {offsets = [0, 0], sizes = [4, 256], strides = [1, 1]} : vector<16x256xf32> to vector<4x256xf32>
    %c0_26 = arith.constant 0 : index
    %c0_27 = arith.constant 0 : index
    %c0_28 = arith.constant 0 : index
    %c0_29 = arith.constant 0 : index
    %36 = vector.load %arg7[%c0_26, %c0_27, %c0_28, %c0_29] : memref<2x1x4x256xf32, #tpu.memory_space<vmem>>, vector<1x1x4x256xf32>
    %37 = vector.shape_cast %36 : vector<1x1x4x256xf32> to vector<4x256xf32>
    %38 = vector.shape_cast %35 : vector<4x256xf32> to vector<1x1x4x256xf32>
    tpu.vector_store %arg7[%c0_26, %c0_27, %c0_28, %c0_29], %38 {strides = array<i32>} : memref<2x1x4x256xf32, #tpu.memory_space<vmem>>, vector<1x1x4x256xf32>,
    %39 = vector.extract_strided_slice %34 {offsets = [8, 0], sizes = [4, 256], strides = [1, 1]} : vector<16x256xf32> to vector<4x256xf32>
    %c1_30 = arith.constant 1 : index
    %c0_31 = arith.constant 0 : index
    %c0_32 = arith.constant 0 : index
    %c0_33 = arith.constant 0 : index
    %40 = vector.load %arg7[%c1_30, %c0_31, %c0_32, %c0_33] : memref<2x1x4x256xf32, #tpu.memory_space<vmem>>, vector<1x1x4x256xf32>
    %41 = vector.shape_cast %40 : vector<1x1x4x256xf32> to vector<4x256xf32>
    %42 = vector.shape_cast %39 : vector<4x256xf32> to vector<1x1x4x256xf32>
    tpu.vector_store %arg7[%c1_30, %c0_31, %c0_32, %c0_33], %42 {strides = array<i32>} : memref<2x1x4x256xf32, #tpu.memory_space<vmem>>, vector<1x1x4x256xf32>,
    return
  }
  func.func @transform_0(%arg0: i32, %arg1: i32) -> (i32, i32, i32, i32) {
    %c0_i32 = arith.constant 0 : i32
    %c0_i32_0 = arith.constant 0 : i32
    %c0_i32_1 = arith.constant 0 : i32
    return %c0_i32, %arg0, %c0_i32_0, %arg1 : i32, i32, i32, i32
  }
  func.func @transform_1(%arg0: i32, %arg1: i32) -> (i32, i32, i32, i32) {
    %c1_i32 = arith.constant 1 : i32
    %0 = arith.addi %arg1, %c1_i32 : i32
    %c1_i32_0 = arith.constant 1 : i32
    %1 = arith.muli %0, %c1_i32_0 : i32
    %c0_i32 = arith.constant 0 : i32
    %c0_i32_1 = arith.constant 0 : i32
    %c0_i32_2 = arith.constant 0 : i32
    return %c0_i32, %arg0, %c0_i32_1, %1 : i32, i32, i32, i32
  }
  func.func @transform_2(%arg0: i32, %arg1: i32) -> (i32, i32) {
    %c0_i32 = arith.constant 0 : i32
    %c0_i32_0 = arith.constant 0 : i32
    %c0_i32_1 = arith.constant 0 : i32
    return %c0_i32, %c0_i32_0 : i32, i32
  }
  func.func @transform_3(%arg0: i32, %arg1: i32) -> (i32, i32, i32) {
    %c0_i32 = arith.constant 0 : i32
    %c0_i32_0 = arith.constant 0 : i32
    %c0_i32_1 = arith.constant 0 : i32
    %c0_i32_2 = arith.constant 0 : i32
    return %c0_i32, %c0_i32_0, %c0_i32_1 : i32, i32, i32
  }
  func.func @transform_4(%arg0: i32, %arg1: i32) -> (i32, i32) {
    %c0_i32 = arith.constant 0 : i32
    %c0_i32_0 = arith.constant 0 : i32
    %c0_i32_1 = arith.constant 0 : i32
    return %c0_i32, %c0_i32_0 : i32, i32
  }
  func.func @transform_5(%arg0: i32, %arg1: i32) -> (i32, i32, i32, i32) {
    %c0_i32 = arith.constant 0 : i32
    %c0_i32_0 = arith.constant 0 : i32
    %c0_i32_1 = arith.constant 0 : i32
    return %c0_i32, %arg0, %c0_i32_0, %arg1 : i32, i32, i32, i32
  }
}

</mosaic_0001>

<llo_original>
// kernel: tpu_custom_call.1
$region0: #{tpu_custom_call.1}
  #allocation0 [shape = 'u32[]', space=smem, size = 0x4, offset = 0x4, fixed_abs, tag = 'smem constant byte address 0x4 - core index']
  #allocation1 [shape = 'u32[72,128]{1,0:T(1,128)}', space=vmem, size = 0x9000, scoped, tag = 'internal scratch']
  %s0 = inlined_call_operand.hbm [shape: f32[2,2,8,384], index: 0, kind: input, shape index: {}]
  %s1 = inlined_call_operand.hbm [shape: f32[2,2,8,384], index: 1, kind: input, shape index: {}]
  %s2 = inlined_call_operand.hbm [shape: f32[32,80], index: 2, kind: input, shape index: {}]
  %s3 = inlined_call_operand.hbm [shape: f32[2,128,256], index: 3, kind: input, shape index: {}]
  %s4 = inlined_call_operand.vmem [shape: f32[16,1], index: 4, kind: input, shape index: {}]
  %s5 = inlined_call_operand.hbm [shape: f32[2,2,4,512], index: 5, kind: output, shape index: {}]
  %s6 = sld [smem:[#allocation0]]
  $region69: #{tpu_custom_call.1} parent=0
    _
  %s8 = ssub.s32 1, %s6
  %s9 = scalar_select 0, %s8, %s6
  $region1: #{tpu_custom_call.1} parent=0
    #allocation2 [shape = 'u8[16384]{0}', space=vmem, size = 0x4000, scoped, tag = 'input window, operand 0']
    #allocation3 [shape = 's32[2]{0}', space=sflag, size = 0x8, scoped, tag = 'scoped memory for tpu_custom_call.1']
    #allocation4 [shape = 's32[2]{0}', space=sflag, size = 0x8, scoped, tag = 'scoped memory for tpu_custom_call.1']
    #allocation5 [shape = 'u8[16384]{0}', space=vmem, size = 0x4000, scoped, tag = 'input window, operand 1']
    #allocation6 [shape = 's32[2]{0}', space=sflag, size = 0x8, scoped, tag = 'scoped memory for tpu_custom_call.1']
    #allocation7 [shape = 'u8[16384]{0}', space=vmem, size = 0x4000, scoped, tag = 'input window, operand 2, single buffered']
    #allocation8 [shape = 'u8[262144]{0}', space=vmem, size = 0x40000, scoped, tag = 'input window, operand 3, single buffered']
    #allocation9 [shape = 's32[1]{0}', space=sflag, size = 0x4, scoped, tag = 'scoped memory for tpu_custom_call.1']
    #allocation10 [shape = 'u8[16384]{0}', space=vmem, size = 0x4000, scoped, tag = 'output window, operand 0']
    %10 = vsyncpa [#allocation3], 0
    %s11 = scalar_lea.sflag [#allocation3], 1
    %12 = vsyncpa %s11, 0
    %13 = vsyncpa [#allocation6], 0
    %s14 = scalar_lea.sflag [#allocation6], 1
    %15 = vsyncpa %s14, 0
    %16 = vsyncpa [#allocation9], 0
    %17 = vsyncpa [#allocation4], 0
    %s18 = scalar_lea.sflag [#allocation4], 1
    %19 = vsyncpa %s18, 0
    loop: start=0, step=1, limit=6
    $region2: #{tpu_custom_call.1} parent=1 // loop_pre_header
      _
    $region3: #{tpu_custom_call.1} parent=1 // loop_header
      %s21 = sphi 0, %s25
      %p22 = scmp.ge.s32.totalorder %s21, 6
      %s28 = sphi 0, %s40
      %s29 = sphi 0, %s36
      %s30 = sphi 0, %s28
      %s31 = sphi 0, %s29
      %s32 = sphi 0, %s30
      %s33 = sphi 0, %s31
      %s45 = sphi 0, %s47
      %s48 = sphi 0, %s45
      %s49 = sphi 0, %s48
      %s65 = sphi 0, %s49
      %s75 = sphi 0, %s77
      %s78 = sphi 0, %s75
      %s79 = sphi 0, %s78
      %s95 = sphi 0, %s79
      %s99 = sphi 0, %s99
      %s101 = sphi 0, %s99
      %s102 = sphi 0, %s101
      %s116 = sphi 0, %s102
      %s120 = sphi 0, %s120
      %s122 = sphi 0, %s120
      %s123 = sphi 0, %s122
      %s137 = sphi 0, %s123
      %s141 = sphi 0, %s141
      %s143 = sphi 0, %s141
      %s144 = sphi 0, %s143
      %s158 = sphi 0, %s144
      %s166 = sphi 0, %s168
      %s169 = sphi 0, %s166
      %s170 = sphi 0, %s169
      %s186 = sphi 0, %s170
    $region4: #{tpu_custom_call.1} parent=1 // loop_header_branch
      %24 = sbr.rel (%p22) target = $region8
    $region5: #{tpu_custom_call.1} parent=1 // loop_body
      %s26 = ssub.s32 %s21, 1
      %s27 = ssub.s32 %s21, 2
      %s34 = sadd.s32 1, %s29
      %p35 = scmp.ge.s32.totalorder %s34, 2
      %s36 = scalar_select %p35, 0, %s34
      %s37 = sadd.s32 1, %s28
      %s38 = scalar_select %p35, %s37, %s28
      %p39 = scmp.ge.s32.totalorder %s38, 2
      %s40 = scalar_select %p39, 0, %s38
      %s41 = ssub.s32 %s28, %s40
      %s42 = ssub.s32 %s29, %s36
      %s43 = sor.u32 %s41, %s42
      %p44 = scmp.eq.s32.totalorder %s43, 0
      %s46 = sadd.s32 %s45, 1
      %s47 = scalar_select %p44, %s45, %s46
      %p50 = pneg %p44
      %p51 = scmp.eq.s32.totalorder %s21, 3
      %p52 = por %p50, %p51
      %p53 = scmp.ne.s32.totalorder %s45, %s48
      %p54 = scmp.eq.s32.totalorder %s21, 0
      %p55 = por %p53, %p54
      %p56 = scmp.ne.s32.totalorder %s45, %s48
      %p57 = scmp.eq.s32.totalorder %s26, 3
      %p58 = por %p56, %p57
      %p59 = scmp.ne.s32.totalorder %s48, %s49
      %p60 = scmp.eq.s32.totalorder %s26, 0
      %p61 = por %p59, %p60
      %p62 = scmp.ne.s32.totalorder %s48, %s49
      %p63 = scmp.eq.s32.totalorder %s27, 3
      %p64 = por %p62, %p63
      %p66 = scmp.ne.s32.totalorder %s49, %s65
      %p67 = scmp.eq.s32.totalorder %s27, 0
      %p68 = por %p66, %p67
      %s69 = sadd.s32 %s29, 1
      %s70 = sadd.s32 %s36, 1
      %s71 = ssub.s32 %s28, %s40
      %s72 = ssub.s32 %s69, %s70
      %s73 = sor.u32 %s71, %s72
      %p74 = scmp.eq.s32.totalorder %s73, 0
      %s76 = sadd.s32 %s75, 1
      %s77 = scalar_select %p74, %s75, %s76
      %p80 = pneg %p74
      %p81 = scmp.eq.s32.totalorder %s21, 3
      %p82 = por %p80, %p81
      %p83 = scmp.ne.s32.totalorder %s75, %s78
      %p84 = scmp.eq.s32.totalorder %s21, 0
      %p85 = por %p83, %p84
      %p86 = scmp.ne.s32.totalorder %s75, %s78
      %p87 = scmp.eq.s32.totalorder %s26, 3
      %p88 = por %p86, %p87
      %p89 = scmp.ne.s32.totalorder %s78, %s79
      %p90 = scmp.eq.s32.totalorder %s26, 0
      %p91 = por %p89, %p90
      %p92 = scmp.ne.s32.totalorder %s78, %s79
      %p93 = scmp.eq.s32.totalorder %s27, 3
      %p94 = por %p92, %p93
      %p96 = scmp.ne.s32.totalorder %s79, %s95
      %p97 = scmp.eq.s32.totalorder %s27, 0
      %p98 = por %p96, %p97
      %s100 = sadd.s32 %s99, 1
      %p103 = scmp.eq.s32.totalorder %s21, 3
      %p104 = scmp.ne.s32.totalorder %s99, %s101
      %p105 = scmp.eq.s32.totalorder %s21, 0
      %p106 = por %p104, %p105
      %p107 = scmp.ne.s32.totalorder %s99, %s101
      %p108 = scmp.eq.s32.totalorder %s26, 3
      %p109 = por %p107, %p108
      %p110 = scmp.ne.s32.totalorder %s101, %s102
      %p111 = scmp.eq.s32.totalorder %s26, 0
      %p112 = por %p110, %p111
      %p113 = scmp.ne.s32.totalorder %s101, %s102
      %p114 = scmp.eq.s32.totalorder %s27, 3
      %p115 = por %p113, %p114
      %p117 = scmp.ne.s32.totalorder %s102, %s116
      %p118 = scmp.eq.s32.totalorder %s27, 0
      %p119 = por %p117, %p118
      %s121 = sadd.s32 %s120, 1
      %p124 = scmp.eq.s32.totalorder %s21, 3
      %p125 = scmp.ne.s32.totalorder %s120, %s122
      %p126 = scmp.eq.s32.totalorder %s21, 0
      %p127 = por %p125, %p126
      %p128 = scmp.ne.s32.totalorder %s120, %s122
      %p129 = scmp.eq.s32.totalorder %s26, 3
      %p130 = por %p128, %p129
      %p131 = scmp.ne.s32.totalorder %s122, %s123
      %p132 = scmp.eq.s32.totalorder %s26, 0
      %p133 = por %p131, %p132
      %p134 = scmp.ne.s32.totalorder %s122, %s123
      %p135 = scmp.eq.s32.totalorder %s27, 3
      %p136 = por %p134, %p135
      %p138 = scmp.ne.s32.totalorder %s123, %s137
      %p139 = scmp.eq.s32.totalorder %s27, 0
      %p140 = por %p138, %p139
      %s142 = sadd.s32 %s141, 1
      %p145 = scmp.eq.s32.totalorder %s21, 3
      %p146 = scmp.ne.s32.totalorder %s141, %s143
      %p147 = scmp.eq.s32.totalorder %s21, 0
      %p148 = por %p146, %p147
      %p149 = scmp.ne.s32.totalorder %s141, %s143
      %p150 = scmp.eq.s32.totalorder %s26, 3
      %p151 = por %p149, %p150
      %p152 = scmp.ne.s32.totalorder %s143, %s144
      %p153 = scmp.eq.s32.totalorder %s26, 0
      %p154 = por %p152, %p153
      %p155 = scmp.ne.s32.totalorder %s143, %s144
      %p156 = scmp.eq.s32.totalorder %s27, 3
      %p157 = por %p155, %p156
      %p159 = scmp.ne.s32.totalorder %s144, %s158
      %p160 = scmp.eq.s32.totalorder %s27, 0
      %p161 = por %p159, %p160
      %s162 = ssub.s32 %s28, %s40
      %s163 = ssub.s32 %s29, %s36
      %s164 = sor.u32 %s162, %s163
      %p165 = scmp.eq.s32.totalorder %s164, 0
      %s167 = sadd.s32 %s166, 1
      %s168 = scalar_select %p165, %s166, %s167
      %p171 = pneg %p165
      %p172 = scmp.eq.s32.totalorder %s21, 3
      %p173 = por %p171, %p172
      %p174 = scmp.ne.s32.totalorder %s166, %s169
      %p175 = scmp.eq.s32.totalorder %s21, 0
      %p176 = por %p174, %p175
      %p177 = scmp.ne.s32.totalorder %s166, %s169
      %p178 = scmp.eq.s32.totalorder %s26, 3
      %p179 = por %p177, %p178
      %p180 = scmp.ne.s32.totalorder %s169, %s170
      %p181 = scmp.eq.s32.totalorder %s26, 0
      %p182 = por %p180, %p181
      %p183 = scmp.ne.s32.totalorder %s169, %s170
      %p184 = scmp.eq.s32.totalorder %s27, 3
      %p185 = por %p183, %p184
      %p187 = scmp.ne.s32.totalorder %s170, %s186
      %p188 = scmp.eq.s32.totalorder %s27, 0
      %p189 = por %p187, %p188
      %p190 = scmp.le.s32.totalorder 1, %s21
      %p191 = scmp.lt.s32.totalorder %s21, 5
      %p192 = pnand %p190, %p191
      %p193 = pneg %p192
      // Predicated region
      $region9: #{tpu_custom_call.1} parent=5 // pred_check
        _
      $region10: #{tpu_custom_call.1} parent=5 // pred_check_branch
        %195 = sbr.rel (%p192) target = $region12
      $region11: #{tpu_custom_call.1} parent=5 // pred_region
        %s196 = ssub.s32 %s21, 1
        // Predicated region
        $region13: #{tpu_custom_call.1} parent=11 // pred_check
          %p197 = pneg %p112
        $region14: #{tpu_custom_call.1} parent=11 // pred_check_branch
          %199 = sbr.rel (%p197) target = $region16
        $region15: #{tpu_custom_call.1} parent=11 // pred_region
          %201 = vsyncadd [#allocation6], 0
          %s202 = sshll.u32 %s2, 4
          %s203 = int_to_ptr.hbm [resolvable:$true] %s202
          %s204 = sshll.u32 [#allocation7], 4
          %s205 = int_to_ptr.vmem [resolvable:$true] %s204
          %210 = dma.hbm_to_vmem [thread:$0]  %s203, 512, %s205, [#allocation6], 128, 128, 8
        $region16: #{tpu_custom_call.1} parent=11 // pred_fallthru
          _
        // Predicated region
        $region17: #{tpu_custom_call.1} parent=11 // pred_check
          %p211 = pneg %p133
        $region18: #{tpu_custom_call.1} parent=11 // pred_check_branch
          %213 = sbr.rel (%p211) target = $region20
        $region19: #{tpu_custom_call.1} parent=11 // pred_region
          %215 = vsyncadd [#allocation9], 0
          %s216 = sshll.u32 %s3, 4
          %s217 = int_to_ptr.hbm [resolvable:$true] %s216
          %s218 = sshll.u32 [#allocation8], 4
          %s219 = int_to_ptr.vmem [resolvable:$true] %s218
          %224 = dma.hbm_to_vmem [thread:$0]  %s217, 8192, %s219, [#allocation9], 256, 256, 16
        $region20: #{tpu_custom_call.1} parent=11 // pred_fallthru
          _
        // Predicated region
        $region21: #{tpu_custom_call.1} parent=11 // pred_check
          %p225 = pneg %p154
        $region22: #{tpu_custom_call.1} parent=11 // pred_check_branch
          %227 = sbr.rel (%p225) target = $region24
        $region23: #{tpu_custom_call.1} parent=11 // pred_region
          _
        $region24: #{tpu_custom_call.1} parent=11 // pred_fallthru
          _
      $region12: #{tpu_custom_call.1} parent=5 // pred_fallthru
        _
      %p228 = scmp.lt.s32.totalorder %s21, 4
      // Predicated region
      $region25: #{tpu_custom_call.1} parent=5 // pred_check
        %p229 = pneg %p228
      $region26: #{tpu_custom_call.1} parent=5 // pred_check_branch
        %231 = sbr.rel (%p229) target = $region28
      $region27: #{tpu_custom_call.1} parent=5 // pred_region
        // Predicated region
        $region29: #{tpu_custom_call.1} parent=27 // pred_check
          %p232 = pneg %p55
        $region30: #{tpu_custom_call.1} parent=27 // pred_check_branch
          %234 = sbr.rel (%p232) target = $region32
        $region31: #{tpu_custom_call.1} parent=27 // pred_region
          %s235 = sand.u32 %s45, 1
          %s236 = scalar_lea.sflag [#allocation3], %s235
          %s237 = sand.u32 %s45, 1
          %s238 = smul.addr %s237, 16
          %s239 = scalar_lea.vmem [#allocation2], %s238
          %241 = vsyncadd %s236, 0
          %s242 = smul.addr %s28, 3
          %s243 = sadd.s32 %s29, %s242
          %s244 = smul.addr %s243, 8
          %s245 = scalar_lea.hbm %s0, %s244
          %s246 = sshll.u32 %s245, 4
          %s247 = int_to_ptr.hbm [resolvable:$true] %s246
          %s248 = sshll.u32 %s239, 4
          %s249 = int_to_ptr.vmem [resolvable:$true] %s248
          %254 = dma.hbm_to_vmem [thread:$0]  %s247, 256, %s249, %s236, 768, 128, 8
        $region32: #{tpu_custom_call.1} parent=27 // pred_fallthru
          _
        // Predicated region
        $region33: #{tpu_custom_call.1} parent=27 // pred_check
          %p255 = pneg %p85
        $region34: #{tpu_custom_call.1} parent=27 // pred_check_branch
          %257 = sbr.rel (%p255) target = $region36
        $region35: #{tpu_custom_call.1} parent=27 // pred_region
          %s258 = sand.u32 %s21, 1
          %s259 = scalar_lea.sflag [#allocation6], %s258
          %s260 = sand.u32 %s75, 1
          %s261 = smul.addr %s260, 16
          %s262 = scalar_lea.vmem [#allocation5], %s261
          %s263 = sadd.s32 %s29, 1
          %265 = vsyncadd %s259, 0
          %s266 = smul.addr %s28, 3
          %s267 = sadd.s32 %s263, %s266
          %s268 = smul.addr %s267, 8
          %s269 = scalar_lea.hbm %s1, %s268
          %s270 = sshll.u32 %s269, 4
          %s271 = int_to_ptr.hbm [resolvable:$true] %s270
          %s272 = sshll.u32 %s262, 4
          %s273 = int_to_ptr.vmem [resolvable:$true] %s272
          %278 = dma.hbm_to_vmem [thread:$0]  %s271, 256, %s273, %s259, 768, 128, 8
        $region36: #{tpu_custom_call.1} parent=27 // pred_fallthru
          _
      $region28: #{tpu_custom_call.1} parent=5 // pred_fallthru
        _
      %p279 = scmp.le.s32.totalorder 1, %s21
      %p280 = scmp.lt.s32.totalorder %s21, 5
      %p281 = pnand %p279, %p280
      %p282 = pneg %p281
      // Predicated region
      $region37: #{tpu_custom_call.1} parent=5 // pred_check
        _
      $region38: #{tpu_custom_call.1} parent=5 // pred_check_branch
        %284 = sbr.rel (%p281) target = $region40
      $region39: #{tpu_custom_call.1} parent=5 // pred_region
        %s285 = ssub.s32 %s21, 1
        %s286 = sand.u32 %s48, 1
        %s287 = scalar_lea.sflag [#allocation3], %s286
        %s288 = sand.u32 %s48, 1
        %s289 = smul.addr %s288, 16
        %s290 = scalar_lea.vmem [#allocation2], %s289
        // Predicated region
        $region41: #{tpu_custom_call.1} parent=39 // pred_check
          %p291 = pneg %p61
        $region42: #{tpu_custom_call.1} parent=39 // pred_check_branch
          %293 = sbr.rel (%p291) target = $region44
        $region43: #{tpu_custom_call.1} parent=39 // pred_region
          %295 = dma.done %s287, 256
        $region44: #{tpu_custom_call.1} parent=39 // pred_fallthru
          _
        %s296 = sand.u32 %s26, 1
        %s297 = scalar_lea.sflag [#allocation6], %s296
        %s298 = sand.u32 %s78, 1
        %s299 = smul.addr %s298, 16
        %s300 = scalar_lea.vmem [#allocation5], %s299
        // Predicated region
        $region45: #{tpu_custom_call.1} parent=39 // pred_check
          %p301 = pneg %p91
        $region46: #{tpu_custom_call.1} parent=39 // pred_check_branch
          %303 = sbr.rel (%p301) target = $region48
        $region47: #{tpu_custom_call.1} parent=39 // pred_region
          %305 = dma.done %s297, 256
        $region48: #{tpu_custom_call.1} parent=39 // pred_fallthru
          _
        // Predicated region
        $region49: #{tpu_custom_call.1} parent=39 // pred_check
          %p306 = pneg %p112
        $region50: #{tpu_custom_call.1} parent=39 // pred_check_branch
          %308 = sbr.rel (%p306) target = $region52
        $region51: #{tpu_custom_call.1} parent=39 // pred_region
          %310 = dma.done [#allocation6], 512
        $region52: #{tpu_custom_call.1} parent=39 // pred_fallthru
          _
        // Predicated region
        $region53: #{tpu_custom_call.1} parent=39 // pred_check
          %p311 = pneg %p133
        $region54: #{tpu_custom_call.1} parent=39 // pred_check_branch
          %313 = sbr.rel (%p311) target = $region56
        $region55: #{tpu_custom_call.1} parent=39 // pred_region
          %315 = dma.done [#allocation9], 8192
        $region56: #{tpu_custom_call.1} parent=39 // pred_fallthru
          _
        %s316 = sand.u32 %s48, 1
        %s317 = scalar_lea.sflag [#allocation3], %s316
        %s318 = sand.u32 %s48, 1
        %s319 = smul.addr %s318, 16
        %s320 = scalar_lea.vmem [#allocation2], %s319
        %p321 = pneg %p61
        %p322 = pneg %p58
        %s323 = sand.u32 %s26, 1
        %s324 = scalar_lea.sflag [#allocation6], %s323
        %s325 = sand.u32 %s78, 1
        %s326 = smul.addr %s325, 16
        %s327 = scalar_lea.vmem [#allocation5], %s326
        %p328 = pneg %p91
        %p329 = pneg %p88
        %p330 = pneg %p112
        %p331 = pneg %p109
        %p332 = pneg %p133
        %p333 = pneg %p130
        %p334 = pneg %p154
        %p335 = pneg %p151
        %p336 = pneg %p182
        %p337 = pneg %p179
        %s338 = sand.u32 %s169, 1
        %s339 = scalar_lea.sflag [#allocation4], %s338
        %s340 = sand.u32 %s169, 1
        %s341 = smul.addr %s340, 16
        %s342 = scalar_lea.vmem [#allocation10], %s341
        %s343 = sadd.s32 %s31, 1
        %s344 = smul.u32 2, %s31
        %v345 = vld [vmem:[%s290] sm:$0xff]
        %v346 = vld [vmem:[%s300] sm:$0xff]
        %s347 = scalar_lea.vmem %s290, 8 [#allocation2]
        %v348 = vld [vmem:[%s347] sm:$0xff]
        %s349 = scalar_lea.vmem %s300, 8 [#allocation5]
        %v350 = vld [vmem:[%s349] sm:$0xff]
        %353 = vrot.lane.b32.xlu0 %v345, 127
        %v354 = vpop.permute.xlu0 %353
        %355 = vrot.lane.b32.xlu0 %v346, 127
        %v356 = vpop.permute.xlu0 %355
        %vm357 = vcmask 1039360
        %v358 = vsel %vm357, %v354, %v356
        %360 = vrot.lane.b32.xlu0 %v345, 126
        %v361 = vpop.permute.xlu0 %360
        %362 = vrot.lane.b32.xlu0 %v346, 126
        %v363 = vpop.permute.xlu0 %362
        %vm364 = vcmask 1031168
        %v365 = vsel %vm364, %v361, %v363
        %367 = vrot.lane.b32.xlu0 %v345, 125
        %v368 = vpop.permute.xlu0 %367
        %369 = vrot.lane.b32.xlu0 %v346, 125
        %v370 = vpop.permute.xlu0 %369
        %vm371 = vcmask 1022976
        %v372 = vsel %vm371, %v368, %v370
        %374 = vrot.lane.b32.xlu0 %v345, 124
        %v375 = vpop.permute.xlu0 %374
        %376 = vrot.lane.b32.xlu0 %v346, 124
        %v377 = vpop.permute.xlu0 %376
        %vm378 = vcmask 1014784
        %v379 = vsel %vm378, %v375, %v377
        %383 = vrot.lane.b32.xlu0 %v348, 127
        %v384 = vpop.permute.xlu0 %383
        %385 = vrot.lane.b32.xlu0 %v350, 127
        %v386 = vpop.permute.xlu0 %385
        %v387 = vsel %vm357, %v384, %v386
        %389 = vrot.lane.b32.xlu0 %v348, 126
        %v390 = vpop.permute.xlu0 %389
        %391 = vrot.lane.b32.xlu0 %v350, 126
        %v392 = vpop.permute.xlu0 %391
        %v393 = vsel %vm364, %v390, %v392
        %395 = vrot.lane.b32.xlu0 %v348, 125
        %v396 = vpop.permute.xlu0 %395
        %397 = vrot.lane.b32.xlu0 %v350, 125
        %v398 = vpop.permute.xlu0 %397
        %v399 = vsel %vm371, %v396, %v398
        %401 = vrot.lane.b32.xlu0 %v348, 124
        %v402 = vpop.permute.xlu0 %401
        %403 = vrot.lane.b32.xlu0 %v350, 124
        %v404 = vpop.permute.xlu0 %403
        %v405 = vsel %vm378, %v402, %v404
        %v407 = vld [vmem:[#allocation7] sm:$0xff]
        %v408 = vld [vmem:[#allocation7 + $0x8] sm:$0xff]
        %v409 = vld [vmem:[#allocation7 + $0x10] sm:$0xff]
        %v410 = vld [vmem:[#allocation7 + $0x18] sm:$0xff]
        %vm411 = vcmask 654336
        %v413 = vsel %vm411, %v407, 0
        %v416 = vsel %vm411, %v408, 0
        %v419 = vsel %vm411, %v409, 0
        %v422 = vsel %vm411, %v410, 0
        %424 = vmatpush.msra.mxu0 0.0
        %425 = vmatpush.msra.mxu0 0.0
        %426 = vmatpush.msra.mxu0 0.0
        %427 = vmatpush.msra.mxu0 0.0
        %428 = vmatpush.msra.mxu0 0.0
        %429 = vmatpush.msra.mxu0 0.0
        %v430 = vand.u32 %v405, 4294901760
        %431 = vmatpush.msra.mxu0 %v430
        %v432 = vand.u32 %v399, 4294901760
        %433 = vmatpush.msra.mxu0 %v432
        %v434 = vand.u32 %v393, 4294901760
        %435 = vmatpush.msra.mxu0 %v434
        %v436 = vand.u32 %v387, 4294901760
        %437 = vmatpush.msra.mxu0 %v436
        %v438 = vand.u32 %v348, 4294901760
        %439 = vmatpush.msra.mxu0 %v438
        %v440 = vand.u32 %v379, 4294901760
        %441 = vmatpush.msra.mxu0 %v440
        %v442 = vand.u32 %v372, 4294901760
        %443 = vmatpush.msra.mxu0 %v442
        %v444 = vand.u32 %v365, 4294901760
        %445 = vmatpush.msra.mxu0 %v444
        %v446 = vand.u32 %v358, 4294901760
        %447 = vmatpush.msra.mxu0 %v446
        %v448 = vand.u32 %v345, 4294901760
        %449 = vmatpush.msra.mxu0 %v448
        %v450 = vand.u32 %v413, 4294901760
        %v451 = vsub.f32 %v413, %v450
        %v452 = vand.u32 %v451, 4294901760
        %v453 = vsub.f32 %v451, %v452
        %v454 = vand.u32 %v453, 4294901760
        %455 = vmatmul.f32.gmra.mxu0 %v454
        %v456 = vpop.f32.mrf.mxu0
        %v457 = vadd.f32 0.0, %v456
        %v458 = vand.u32 %v416, 4294901760
        %v459 = vsub.f32 %v416, %v458
        %v460 = vand.u32 %v459, 4294901760
        %v461 = vsub.f32 %v459, %v460
        %v462 = vand.u32 %v461, 4294901760
        %463 = vmatmul.f32.gmra.mxu0 %v462
        %v464 = vpop.f32.mrf.mxu0
        %v465 = vadd.f32 0.0, %v464
        %v466 = vand.u32 %v419, 4294901760
        %v467 = vsub.f32 %v419, %v466
        %v468 = vand.u32 %v467, 4294901760
        %v469 = vsub.f32 %v467, %v468
        %v470 = vand.u32 %v469, 4294901760
        %471 = vmatmul.f32.gmra.mxu0 %v470
        %v472 = vpop.f32.mrf.mxu0
        %v473 = vadd.f32 0.0, %v472
        %v474 = vand.u32 %v422, 4294901760
        %v475 = vsub.f32 %v422, %v474
        %v476 = vand.u32 %v475, 4294901760
        %v477 = vsub.f32 %v475, %v476
        %v478 = vand.u32 %v477, 4294901760
        %479 = vmatmul.f32.gmra.mxu0 %v478
        %v480 = vpop.f32.mrf.mxu0
        %v481 = vadd.f32 0.0, %v480
        %482 = vdwg.mxu0
        %483 = vmatpush.msra.mxu0 0.0
        %484 = vmatpush.msra.mxu0 0.0
        %485 = vmatpush.msra.mxu0 0.0
        %486 = vmatpush.msra.mxu0 0.0
        %487 = vmatpush.msra.mxu0 0.0
        %488 = vmatpush.msra.mxu0 0.0
        %v489 = vand.u32 %v405, 4294901760
        %v490 = vsub.f32 %v405, %v489
        %v491 = vand.u32 %v490, 4294901760
        %v492 = vsub.f32 %v490, %v491
        %v493 = vand.u32 %v492, 4294901760
        %494 = vmatpush.msra.mxu0 %v493
        %v495 = vand.u32 %v399, 4294901760
        %v496 = vsub.f32 %v399, %v495
        %v497 = vand.u32 %v496, 4294901760
        %v498 = vsub.f32 %v496, %v497
        %v499 = vand.u32 %v498, 4294901760
        %500 = vmatpush.msra.mxu0 %v499
        %v501 = vand.u32 %v393, 4294901760
        %v502 = vsub.f32 %v393, %v501
        %v503 = vand.u32 %v502, 4294901760
        %v504 = vsub.f32 %v502, %v503
        %v505 = vand.u32 %v504, 4294901760
        %506 = vmatpush.msra.mxu0 %v505
        %v507 = vand.u32 %v387, 4294901760
        %v508 = vsub.f32 %v387, %v507
        %v509 = vand.u32 %v508, 4294901760
        %v510 = vsub.f32 %v508, %v509
        %v511 = vand.u32 %v510, 4294901760
        %512 = vmatpush.msra.mxu0 %v511
        %v513 = vand.u32 %v348, 4294901760
        %v514 = vsub.f32 %v348, %v513
        %v515 = vand.u32 %v514, 4294901760
        %v516 = vsub.f32 %v514, %v515
        %v517 = vand.u32 %v516, 4294901760
        %518 = vmatpush.msra.mxu0 %v517
        %v519 = vand.u32 %v379, 4294901760
        %v520 = vsub.f32 %v379, %v519
        %v521 = vand.u32 %v520, 4294901760
        %v522 = vsub.f32 %v520, %v521
        %v523 = vand.u32 %v522, 4294901760
        %524 = vmatpush.msra.mxu0 %v523
        %v525 = vand.u32 %v372, 4294901760
        %v526 = vsub.f32 %v372, %v525
        %v527 = vand.u32 %v526, 4294901760
        %v528 = vsub.f32 %v526, %v527
        %v529 = vand.u32 %v528, 4294901760
        %530 = vmatpush.msra.mxu0 %v529
        %v531 = vand.u32 %v365, 4294901760
        %v532 = vsub.f32 %v365, %v531
        %v533 = vand.u32 %v532, 4294901760
        %v534 = vsub.f32 %v532, %v533
        %v535 = vand.u32 %v534, 4294901760
        %536 = vmatpush.msra.mxu0 %v535
        %v537 = vand.u32 %v358, 4294901760
        %v538 = vsub.f32 %v358, %v537
        %v539 = vand.u32 %v538, 4294901760
        %v540 = vsub.f32 %v538, %v539
        %v541 = vand.u32 %v540, 4294901760
        %542 = vmatpush.msra.mxu0 %v541
        %v543 = vand.u32 %v345, 4294901760
        %v544 = vsub.f32 %v345, %v543
        %v545 = vand.u32 %v544, 4294901760
        %v546 = vsub.f32 %v544, %v545
        %v547 = vand.u32 %v546, 4294901760
        %548 = vmatpush.msra.mxu0 %v547
        %v549 = vand.u32 %v413, 4294901760
        %550 = vmatmul.f32.gmra.mxu0 %v549
        %v551 = vpop.f32.mrf.mxu0
        %v552 = vadd.f32 %v457, %v551
        %v553 = vand.u32 %v416, 4294901760
        %554 = vmatmul.f32.gmra.mxu0 %v553
        %v555 = vpop.f32.mrf.mxu0
        %v556 = vadd.f32 %v465, %v555
        %v557 = vand.u32 %v419, 4294901760
        %558 = vmatmul.f32.gmra.mxu0 %v557
        %v559 = vpop.f32.mrf.mxu0
        %v560 = vadd.f32 %v473, %v559
        %v561 = vand.u32 %v422, 4294901760
        %562 = vmatmul.f32.gmra.mxu0 %v561
        %v563 = vpop.f32.mrf.mxu0
        %v564 = vadd.f32 %v481, %v563
        %565 = vdwg.mxu0
        %566 = vmatpush.msra.mxu0 0.0
        %567 = vmatpush.msra.mxu0 0.0
        %568 = vmatpush.msra.mxu0 0.0
        %569 = vmatpush.msra.mxu0 0.0
        %570 = vmatpush.msra.mxu0 0.0
        %571 = vmatpush.msra.mxu0 0.0
        %v572 = vand.u32 %v405, 4294901760
        %v573 = vsub.f32 %v405, %v572
        %574 = vmatpush.msra.mxu0 %v573
        %v575 = vand.u32 %v399, 4294901760
        %v576 = vsub.f32 %v399, %v575
        %577 = vmatpush.msra.mxu0 %v576
        %v578 = vand.u32 %v393, 4294901760
        %v579 = vsub.f32 %v393, %v578
        %580 = vmatpush.msra.mxu0 %v579
        %v581 = vand.u32 %v387, 4294901760
        %v582 = vsub.f32 %v387, %v581
        %583 = vmatpush.msra.mxu0 %v582
        %v584 = vand.u32 %v348, 4294901760
        %v585 = vsub.f32 %v348, %v584
        %586 = vmatpush.msra.mxu0 %v585
        %v587 = vand.u32 %v379, 4294901760
        %v588 = vsub.f32 %v379, %v587
        %589 = vmatpush.msra.mxu0 %v588
        %v590 = vand.u32 %v372, 4294901760
        %v591 = vsub.f32 %v372, %v590
        %592 = vmatpush.msra.mxu0 %v591
        %v593 = vand.u32 %v365, 4294901760
        %v594 = vsub.f32 %v365, %v593
        %595 = vmatpush.msra.mxu0 %v594
        %v596 = vand.u32 %v358, 4294901760
        %v597 = vsub.f32 %v358, %v596
        %598 = vmatpush.msra.mxu0 %v597
        %v599 = vand.u32 %v345, 4294901760
        %v600 = vsub.f32 %v345, %v599
        %601 = vmatpush.msra.mxu0 %v600
        %v602 = vand.u32 %v413, 4294901760
        %v603 = vsub.f32 %v413, %v602
        %604 = vmatmul.f32.gmra.mxu0 %v603
        %v605 = vpop.f32.mrf.mxu0
        %v606 = vadd.f32 %v552, %v605
        %v607 = vand.u32 %v416, 4294901760
        %v608 = vsub.f32 %v416, %v607
        %609 = vmatmul.f32.gmra.mxu0 %v608
        %v610 = vpop.f32.mrf.mxu0
        %v611 = vadd.f32 %v556, %v610
        %v612 = vand.u32 %v419, 4294901760
        %v613 = vsub.f32 %v419, %v612
        %614 = vmatmul.f32.gmra.mxu0 %v613
        %v615 = vpop.f32.mrf.mxu0
        %v616 = vadd.f32 %v560, %v615
        %v617 = vand.u32 %v422, 4294901760
        %v618 = vsub.f32 %v422, %v617
        %619 = vmatmul.f32.gmra.mxu0 %v618
        %v620 = vpop.f32.mrf.mxu0
        %v621 = vadd.f32 %v564, %v620
        %622 = vdwg.mxu0
        %623 = vmatpush.msra.mxu0 0.0
        %624 = vmatpush.msra.mxu0 0.0
        %625 = vmatpush.msra.mxu0 0.0
        %626 = vmatpush.msra.mxu0 0.0
        %627 = vmatpush.msra.mxu0 0.0
        %628 = vmatpush.msra.mxu0 0.0
        %v629 = vand.u32 %v405, 4294901760
        %630 = vmatpush.msra.mxu0 %v629
        %v631 = vand.u32 %v399, 4294901760
        %632 = vmatpush.msra.mxu0 %v631
        %v633 = vand.u32 %v393, 4294901760
        %634 = vmatpush.msra.mxu0 %v633
        %v635 = vand.u32 %v387, 4294901760
        %636 = vmatpush.msra.mxu0 %v635
        %v637 = vand.u32 %v348, 4294901760
        %638 = vmatpush.msra.mxu0 %v637
        %v639 = vand.u32 %v379, 4294901760
        %640 = vmatpush.msra.mxu0 %v639
        %v641 = vand.u32 %v372, 4294901760
        %642 = vmatpush.msra.mxu0 %v641
        %v643 = vand.u32 %v365, 4294901760
        %644 = vmatpush.msra.mxu0 %v643
        %v645 = vand.u32 %v358, 4294901760
        %646 = vmatpush.msra.mxu0 %v645
        %v647 = vand.u32 %v345, 4294901760
        %648 = vmatpush.msra.mxu0 %v647
        %v649 = vand.u32 %v413, 4294901760
        %v650 = vsub.f32 %v413, %v649
        %v651 = vand.u32 %v650, 4294901760
        %652 = vmatmul.f32.gmra.mxu0 %v651
        %v653 = vpop.f32.mrf.mxu0
        %v654 = vadd.f32 %v606, %v653
        %v655 = vand.u32 %v416, 4294901760
        %v656 = vsub.f32 %v416, %v655
        %v657 = vand.u32 %v656, 4294901760
        %658 = vmatmul.f32.gmra.mxu0 %v657
        %v659 = vpop.f32.mrf.mxu0
        %v660 = vadd.f32 %v611, %v659
        %v661 = vand.u32 %v419, 4294901760
        %v662 = vsub.f32 %v419, %v661
        %v663 = vand.u32 %v662, 4294901760
        %664 = vmatmul.f32.gmra.mxu0 %v663
        %v665 = vpop.f32.mrf.mxu0
        %v666 = vadd.f32 %v616, %v665
        %v667 = vand.u32 %v422, 4294901760
        %v668 = vsub.f32 %v422, %v667
        %v669 = vand.u32 %v668, 4294901760
        %670 = vmatmul.f32.gmra.mxu0 %v669
        %v671 = vpop.f32.mrf.mxu0
        %v672 = vadd.f32 %v621, %v671
        %673 = vdwg.mxu0
        %674 = vmatpush.msra.mxu0 0.0
        %675 = vmatpush.msra.mxu0 0.0
        %676 = vmatpush.msra.mxu0 0.0
        %677 = vmatpush.msra.mxu0 0.0
        %678 = vmatpush.msra.mxu0 0.0
        %679 = vmatpush.msra.mxu0 0.0
        %v680 = vand.u32 %v405, 4294901760
        %v681 = vsub.f32 %v405, %v680
        %v682 = vand.u32 %v681, 4294901760
        %683 = vmatpush.msra.mxu0 %v682
        %v684 = vand.u32 %v399, 4294901760
        %v685 = vsub.f32 %v399, %v684
        %v686 = vand.u32 %v685, 4294901760
        %687 = vmatpush.msra.mxu0 %v686
        %v688 = vand.u32 %v393, 4294901760
        %v689 = vsub.f32 %v393, %v688
        %v690 = vand.u32 %v689, 4294901760
        %691 = vmatpush.msra.mxu0 %v690
        %v692 = vand.u32 %v387, 4294901760
        %v693 = vsub.f32 %v387, %v692
        %v694 = vand.u32 %v693, 4294901760
        %695 = vmatpush.msra.mxu0 %v694
        %v696 = vand.u32 %v348, 4294901760
        %v697 = vsub.f32 %v348, %v696
        %v698 = vand.u32 %v697, 4294901760
        %699 = vmatpush.msra.mxu0 %v698
        %v700 = vand.u32 %v379, 4294901760
        %v701 = vsub.f32 %v379, %v700
        %v702 = vand.u32 %v701, 4294901760
        %703 = vmatpush.msra.mxu0 %v702
        %v704 = vand.u32 %v372, 4294901760
        %v705 = vsub.f32 %v372, %v704
        %v706 = vand.u32 %v705, 4294901760
        %707 = vmatpush.msra.mxu0 %v706
        %v708 = vand.u32 %v365, 4294901760
        %v709 = vsub.f32 %v365, %v708
        %v710 = vand.u32 %v709, 4294901760
        %711 = vmatpush.msra.mxu0 %v710
        %v712 = vand.u32 %v358, 4294901760
        %v713 = vsub.f32 %v358, %v712
        %v714 = vand.u32 %v713, 4294901760
        %715 = vmatpush.msra.mxu0 %v714
        %v716 = vand.u32 %v345, 4294901760
        %v717 = vsub.f32 %v345, %v716
        %v718 = vand.u32 %v717, 4294901760
        %719 = vmatpush.msra.mxu0 %v718
        %v720 = vand.u32 %v413, 4294901760
        %721 = vmatmul.f32.gmra.mxu0 %v720
        %v722 = vpop.f32.mrf.mxu0
        %v723 = vadd.f32 %v654, %v722
        %v724 = vand.u32 %v416, 4294901760
        %725 = vmatmul.f32.gmra.mxu0 %v724
        %v726 = vpop.f32.mrf.mxu0
        %v727 = vadd.f32 %v660, %v726
        %v728 = vand.u32 %v419, 4294901760
        %729 = vmatmul.f32.gmra.mxu0 %v728
        %v730 = vpop.f32.mrf.mxu0
        %v731 = vadd.f32 %v666, %v730
        %v732 = vand.u32 %v422, 4294901760
        %733 = vmatmul.f32.gmra.mxu0 %v732
        %v734 = vpop.f32.mrf.mxu0
        %v735 = vadd.f32 %v672, %v734
        %736 = vdwg.mxu0
        %737 = vmatpush.msra.mxu0 0.0
        %738 = vmatpush.msra.mxu0 0.0
        %739 = vmatpush.msra.mxu0 0.0
        %740 = vmatpush.msra.mxu0 0.0
        %741 = vmatpush.msra.mxu0 0.0
        %742 = vmatpush.msra.mxu0 0.0
        %v743 = vand.u32 %v405, 4294901760
        %744 = vmatpush.msra.mxu0 %v743
        %v745 = vand.u32 %v399, 4294901760
        %746 = vmatpush.msra.mxu0 %v745
        %v747 = vand.u32 %v393, 4294901760
        %748 = vmatpush.msra.mxu0 %v747
        %v749 = vand.u32 %v387, 4294901760
        %750 = vmatpush.msra.mxu0 %v749
        %v751 = vand.u32 %v348, 4294901760
        %752 = vmatpush.msra.mxu0 %v751
        %v753 = vand.u32 %v379, 4294901760
        %754 = vmatpush.msra.mxu0 %v753
        %v755 = vand.u32 %v372, 4294901760
        %756 = vmatpush.msra.mxu0 %v755
        %v757 = vand.u32 %v365, 4294901760
        %758 = vmatpush.msra.mxu0 %v757
        %v759 = vand.u32 %v358, 4294901760
        %760 = vmatpush.msra.mxu0 %v759
        %v761 = vand.u32 %v345, 4294901760
        %762 = vmatpush.msra.mxu0 %v761
        %v763 = vand.u32 %v413, 4294901760
        %764 = vmatmul.f32.gmra.mxu0 %v763
        %v765 = vpop.f32.mrf.mxu0
        %v766 = vadd.f32 %v723, %v765
        %v767 = vand.u32 %v416, 4294901760
        %768 = vmatmul.f32.gmra.mxu0 %v767
        %v769 = vpop.f32.mrf.mxu0
        %v770 = vadd.f32 %v727, %v769
        %v771 = vand.u32 %v419, 4294901760
        %772 = vmatmul.f32.gmra.mxu0 %v771
        %v773 = vpop.f32.mrf.mxu0
        %v774 = vadd.f32 %v731, %v773
        %v775 = vand.u32 %v422, 4294901760
        %776 = vmatmul.f32.gmra.mxu0 %v775
        %v777 = vpop.f32.mrf.mxu0
        %v778 = vadd.f32 %v735, %v777
        %779 = vdwg.mxu0
        %v780 = vld [vmem:[%s4] sm:$0xff]
        %v781 = vld [vmem:[%s4 + $0x8] sm:$0xff]
        %v782 = vld [vmem:[#allocation8] sm:$0xff]
        %v783 = vld [vmem:[#allocation8 + $0x8] sm:$0xff]
        %v784 = vld [vmem:[#allocation8 + $0x10] sm:$0xff]
        %v785 = vld [vmem:[#allocation8 + $0x18] sm:$0xff]
        %v786 = vld [vmem:[#allocation8 + $0x20] sm:$0xff]
        %v787 = vld [vmem:[#allocation8 + $0x28] sm:$0xff]
        %v788 = vld [vmem:[#allocation8 + $0x30] sm:$0xff]
        %v789 = vld [vmem:[#allocation8 + $0x38] sm:$0xff]
        %v790 = vld [vmem:[#allocation8 + $0x40] sm:$0xff]
        %v791 = vld [vmem:[#allocation8 + $0x48] sm:$0xff]
        %v792 = vld [vmem:[#allocation8 + $0x50] sm:$0xff]
        %v793 = vld [vmem:[#allocation8 + $0x58] sm:$0xff]
        %v794 = vld [vmem:[#allocation8 + $0x60] sm:$0xff]
        %v795 = vld [vmem:[#allocation8 + $0x68] sm:$0xff]
        %v796 = vld [vmem:[#allocation8 + $0x70] sm:$0xff]
        %v797 = vld [vmem:[#allocation8 + $0x78] sm:$0xff]
        %v798 = vld [vmem:[#allocation8 + $0x80] sm:$0xff]
        %v799 = vld [vmem:[#allocation8 + $0x88] sm:$0xff]
        %v800 = vld [vmem:[#allocation8 + $0x90] sm:$0xff]
        %v801 = vld [vmem:[#allocation8 + $0x98] sm:$0xff]
        %v802 = vld [vmem:[#allocation8 + $0xa0] sm:$0xff]
        %v803 = vld [vmem:[#allocation8 + $0xa8] sm:$0xff]
        %v804 = vld [vmem:[#allocation8 + $0xb0] sm:$0xff]
        %v805 = vld [vmem:[#allocation8 + $0xb8] sm:$0xff]
        %v806 = vld [vmem:[#allocation8 + $0xc0] sm:$0xff]
        %v807 = vld [vmem:[#allocation8 + $0xc8] sm:$0xff]
        %v808 = vld [vmem:[#allocation8 + $0xd0] sm:$0xff]
        %v809 = vld [vmem:[#allocation8 + $0xd8] sm:$0xff]
        %v810 = vld [vmem:[#allocation8 + $0xe0] sm:$0xff]
        %v811 = vld [vmem:[#allocation8 + $0xe8] sm:$0xff]
        %v812 = vld [vmem:[#allocation8 + $0xf0] sm:$0xff]
        %v813 = vld [vmem:[#allocation8 + $0xf8] sm:$0xff]
        %s814 = scalar_lea.vmem [#allocation8], 256
        %v815 = vld [vmem:[%s814] sm:$0xff]
        %v816 = vld [vmem:[%s814 + $0x8] sm:$0xff]
        %v817 = vld [vmem:[%s814 + $0x10] sm:$0xff]
        %v818 = vld [vmem:[%s814 + $0x18] sm:$0xff]
        %v819 = vld [vmem:[%s814 + $0x20] sm:$0xff]
        %v820 = vld [vmem:[%s814 + $0x28] sm:$0xff]
        %v821 = vld [vmem:[%s814 + $0x30] sm:$0xff]
        %v822 = vld [vmem:[%s814 + $0x38] sm:$0xff]
        %v823 = vld [vmem:[%s814 + $0x40] sm:$0xff]
        %v824 = vld [vmem:[%s814 + $0x48] sm:$0xff]
        %v825 = vld [vmem:[%s814 + $0x50] sm:$0xff]
        %v826 = vld [vmem:[%s814 + $0x58] sm:$0xff]
        %v827 = vld [vmem:[%s814 + $0x60] sm:$0xff]
        %v828 = vld [vmem:[%s814 + $0x68] sm:$0xff]
        %v829 = vld [vmem:[%s814 + $0x70] sm:$0xff]
        %v830 = vld [vmem:[%s814 + $0x78] sm:$0xff]
        %v831 = vld [vmem:[%s814 + $0x80] sm:$0xff]
        %v832 = vld [vmem:[%s814 + $0x88] sm:$0xff]
        %v833 = vld [vmem:[%s814 + $0x90] sm:$0xff]
        %v834 = vld [vmem:[%s814 + $0x98] sm:$0xff]
        %v835 = vld [vmem:[%s814 + $0xa0] sm:$0xff]
        %v836 = vld [vmem:[%s814 + $0xa8] sm:$0xff]
        %v837 = vld [vmem:[%s814 + $0xb0] sm:$0xff]
        %v838 = vld [vmem:[%s814 + $0xb8] sm:$0xff]
        %v839 = vld [vmem:[%s814 + $0xc0] sm:$0xff]
        %v840 = vld [vmem:[%s814 + $0xc8] sm:$0xff]
        %v841 = vld [vmem:[%s814 + $0xd0] sm:$0xff]
        %v842 = vld [vmem:[%s814 + $0xd8] sm:$0xff]
        %v843 = vld [vmem:[%s814 + $0xe0] sm:$0xff]
        %v844 = vld [vmem:[%s814 + $0xe8] sm:$0xff]
        %v845 = vld [vmem:[%s814 + $0xf0] sm:$0xff]
        %v846 = vld [vmem:[%s814 + $0xf8] sm:$0xff]
        %v847 = vand.u32 %v845, 4294901760
        %848 = vmatpush.msra.mxu0 %v847
        %v849 = vand.u32 %v843, 4294901760
        %850 = vmatpush.msra.mxu0 %v849
        %v851 = vand.u32 %v841, 4294901760
        %852 = vmatpush.msra.mxu0 %v851
        %v853 = vand.u32 %v839, 4294901760
        %854 = vmatpush.msra.mxu0 %v853
        %v855 = vand.u32 %v837, 4294901760
        %856 = vmatpush.msra.mxu0 %v855
        %v857 = vand.u32 %v835, 4294901760
        %858 = vmatpush.msra.mxu0 %v857
        %v859 = vand.u32 %v833, 4294901760
        %860 = vmatpush.msra.mxu0 %v859
        %v861 = vand.u32 %v831, 4294901760
        %862 = vmatpush.msra.mxu0 %v861
        %v863 = vand.u32 %v829, 4294901760
        %864 = vmatpush.msra.mxu0 %v863
        %v865 = vand.u32 %v827, 4294901760
        %866 = vmatpush.msra.mxu0 %v865
        %v867 = vand.u32 %v825, 4294901760
        %868 = vmatpush.msra.mxu0 %v867
        %v869 = vand.u32 %v823, 4294901760
        %870 = vmatpush.msra.mxu0 %v869
        %v871 = vand.u32 %v821, 4294901760
        %872 = vmatpush.msra.mxu0 %v871
        %v873 = vand.u32 %v819, 4294901760
        %874 = vmatpush.msra.mxu0 %v873
        %v875 = vand.u32 %v817, 4294901760
        %876 = vmatpush.msra.mxu0 %v875
        %v877 = vand.u32 %v815, 4294901760
        %878 = vmatpush.msra.mxu0 %v877
        %v879 = vand.u32 %v774, 4294901760
        %v880 = vsub.f32 %v774, %v879
        %v881 = vand.u32 %v880, 4294901760
        %v882 = vsub.f32 %v880, %v881
        %v883 = vand.u32 %v882, 4294901760
        %884 = vmatmul.f32.gmra.mxu0 %v883
        %v885 = vpop.f32.mrf.mxu0
        %v886 = vadd.f32 0.0, %v885
        %v887 = vand.u32 %v778, 4294901760
        %v888 = vsub.f32 %v778, %v887
        %v889 = vand.u32 %v888, 4294901760
        %v890 = vsub.f32 %v888, %v889
        %v891 = vand.u32 %v890, 4294901760
        %892 = vmatmul.f32.gmra.mxu0 %v891
        %v893 = vpop.f32.mrf.mxu0
        %v894 = vadd.f32 0.0, %v893
        %895 = vdwg.mxu0
        %v896 = vand.u32 %v845, 4294901760
        %v897 = vsub.f32 %v845, %v896
        %v898 = vand.u32 %v897, 4294901760
        %v899 = vsub.f32 %v897, %v898
        %v900 = vand.u32 %v899, 4294901760
        %901 = vmatpush.msra.mxu0 %v900
        %v902 = vand.u32 %v843, 4294901760
        %v903 = vsub.f32 %v843, %v902
        %v904 = vand.u32 %v903, 4294901760
        %v905 = vsub.f32 %v903, %v904
        %v906 = vand.u32 %v905, 4294901760
        %907 = vmatpush.msra.mxu0 %v906
        %v908 = vand.u32 %v841, 4294901760
        %v909 = vsub.f32 %v841, %v908
        %v910 = vand.u32 %v909, 4294901760
        %v911 = vsub.f32 %v909, %v910
        %v912 = vand.u32 %v911, 4294901760
        %913 = vmatpush.msra.mxu0 %v912
        %v914 = vand.u32 %v839, 4294901760
        %v915 = vsub.f32 %v839, %v914
        %v916 = vand.u32 %v915, 4294901760
        %v917 = vsub.f32 %v915, %v916
        %v918 = vand.u32 %v917, 4294901760
        %919 = vmatpush.msra.mxu0 %v918
        %v920 = vand.u32 %v837, 4294901760
        %v921 = vsub.f32 %v837, %v920
        %v922 = vand.u32 %v921, 4294901760
        %v923 = vsub.f32 %v921, %v922
        %v924 = vand.u32 %v923, 4294901760
        %925 = vmatpush.msra.mxu0 %v924
        %v926 = vand.u32 %v835, 4294901760
        %v927 = vsub.f32 %v835, %v926
        %v928 = vand.u32 %v927, 4294901760
        %v929 = vsub.f32 %v927, %v928
        %v930 = vand.u32 %v929, 4294901760
        %931 = vmatpush.msra.mxu0 %v930
        %v932 = vand.u32 %v833, 4294901760
        %v933 = vsub.f32 %v833, %v932
        %v934 = vand.u32 %v933, 4294901760
        %v935 = vsub.f32 %v933, %v934
        %v936 = vand.u32 %v935, 4294901760
        %937 = vmatpush.msra.mxu0 %v936
        %v938 = vand.u32 %v831, 4294901760
        %v939 = vsub.f32 %v831, %v938
        %v940 = vand.u32 %v939, 4294901760
        %v941 = vsub.f32 %v939, %v940
        %v942 = vand.u32 %v941, 4294901760
        %943 = vmatpush.msra.mxu0 %v942
        %v944 = vand.u32 %v829, 4294901760
        %v945 = vsub.f32 %v829, %v944
        %v946 = vand.u32 %v945, 4294901760
        %v947 = vsub.f32 %v945, %v946
        %v948 = vand.u32 %v947, 4294901760
        %949 = vmatpush.msra.mxu0 %v948
        %v950 = vand.u32 %v827, 4294901760
        %v951 = vsub.f32 %v827, %v950
        %v952 = vand.u32 %v951, 4294901760
        %v953 = vsub.f32 %v951, %v952
        %v954 = vand.u32 %v953, 4294901760
        %955 = vmatpush.msra.mxu0 %v954
        %v956 = vand.u32 %v825, 4294901760
        %v957 = vsub.f32 %v825, %v956
        %v958 = vand.u32 %v957, 4294901760
        %v959 = vsub.f32 %v957, %v958
        %v960 = vand.u32 %v959, 4294901760
        %961 = vmatpush.msra.mxu0 %v960
        %v962 = vand.u32 %v823, 4294901760
        %v963 = vsub.f32 %v823, %v962
        %v964 = vand.u32 %v963, 4294901760
        %v965 = vsub.f32 %v963, %v964
        %v966 = vand.u32 %v965, 4294901760
        %967 = vmatpush.msra.mxu0 %v966
        %v968 = vand.u32 %v821, 4294901760
        %v969 = vsub.f32 %v821, %v968
        %v970 = vand.u32 %v969, 4294901760
        %v971 = vsub.f32 %v969, %v970
        %v972 = vand.u32 %v971, 4294901760
        %973 = vmatpush.msra.mxu0 %v972
        %v974 = vand.u32 %v819, 4294901760
        %v975 = vsub.f32 %v819, %v974
        %v976 = vand.u32 %v975, 4294901760
        %v977 = vsub.f32 %v975, %v976
        %v978 = vand.u32 %v977, 4294901760
        %979 = vmatpush.msra.mxu0 %v978
        %v980 = vand.u32 %v817, 4294901760
        %v981 = vsub.f32 %v817, %v980
        %v982 = vand.u32 %v981, 4294901760
        %v983 = vsub.f32 %v981, %v982
        %v984 = vand.u32 %v983, 4294901760
        %985 = vmatpush.msra.mxu0 %v984
        %v986 = vand.u32 %v815, 4294901760
        %v987 = vsub.f32 %v815, %v986
        %v988 = vand.u32 %v987, 4294901760
        %v989 = vsub.f32 %v987, %v988
        %v990 = vand.u32 %v989, 4294901760
        %991 = vmatpush.msra.mxu0 %v990
        %v992 = vand.u32 %v774, 4294901760
        %993 = vmatmul.f32.gmra.mxu0 %v992
        %v994 = vpop.f32.mrf.mxu0
        %v995 = vadd.f32 %v886, %v994
        %v996 = vand.u32 %v778, 4294901760
        %997 = vmatmul.f32.gmra.mxu0 %v996
        %v998 = vpop.f32.mrf.mxu0
        %v999 = vadd.f32 %v894, %v998
        %1000 = vdwg.mxu0
        %v1001 = vand.u32 %v845, 4294901760
        %v1002 = vsub.f32 %v845, %v1001
        %1003 = vmatpush.msra.mxu0 %v1002
        %v1004 = vand.u32 %v843, 4294901760
        %v1005 = vsub.f32 %v843, %v1004
        %1006 = vmatpush.msra.mxu0 %v1005
        %v1007 = vand.u32 %v841, 4294901760
        %v1008 = vsub.f32 %v841, %v1007
        %1009 = vmatpush.msra.mxu0 %v1008
        %v1010 = vand.u32 %v839, 4294901760
        %v1011 = vsub.f32 %v839, %v1010
        %1012 = vmatpush.msra.mxu0 %v1011
        %v1013 = vand.u32 %v837, 4294901760
        %v1014 = vsub.f32 %v837, %v1013
        %1015 = vmatpush.msra.mxu0 %v1014
        %v1016 = vand.u32 %v835, 4294901760
        %v1017 = vsub.f32 %v835, %v1016
        %1018 = vmatpush.msra.mxu0 %v1017
        %v1019 = vand.u32 %v833, 4294901760
        %v1020 = vsub.f32 %v833, %v1019
        %1021 = vmatpush.msra.mxu0 %v1020
        %v1022 = vand.u32 %v831, 4294901760
        %v1023 = vsub.f32 %v831, %v1022
        %1024 = vmatpush.msra.mxu0 %v1023
        %v1025 = vand.u32 %v829, 4294901760
        %v1026 = vsub.f32 %v829, %v1025
        %1027 = vmatpush.msra.mxu0 %v1026
        %v1028 = vand.u32 %v827, 4294901760
        %v1029 = vsub.f32 %v827, %v1028
        %1030 = vmatpush.msra.mxu0 %v1029
        %v1031 = vand.u32 %v825, 4294901760
        %v1032 = vsub.f32 %v825, %v1031
        %1033 = vmatpush.msra.mxu0 %v1032
        %v1034 = vand.u32 %v823, 4294901760
        %v1035 = vsub.f32 %v823, %v1034
        %1036 = vmatpush.msra.mxu0 %v1035
        %v1037 = vand.u32 %v821, 4294901760
        %v1038 = vsub.f32 %v821, %v1037
        %1039 = vmatpush.msra.mxu0 %v1038
        %v1040 = vand.u32 %v819, 4294901760
        %v1041 = vsub.f32 %v819, %v1040
        %1042 = vmatpush.msra.mxu0 %v1041
        %v1043 = vand.u32 %v817, 4294901760
        %v1044 = vsub.f32 %v817, %v1043
        %1045 = vmatpush.msra.mxu0 %v1044
        %v1046 = vand.u32 %v815, 4294901760
        %v1047 = vsub.f32 %v815, %v1046
        %1048 = vmatpush.msra.mxu0 %v1047
        %v1049 = vand.u32 %v774, 4294901760
        %v1050 = vsub.f32 %v774, %v1049
        %1051 = vmatmul.f32.gmra.mxu0 %v1050
        %v1052 = vpop.f32.mrf.mxu0
        %v1053 = vadd.f32 %v995, %v1052
        %v1054 = vand.u32 %v778, 4294901760
        %v1055 = vsub.f32 %v778, %v1054
        %1056 = vmatmul.f32.gmra.mxu0 %v1055
        %v1057 = vpop.f32.mrf.mxu0
        %v1058 = vadd.f32 %v999, %v1057
        %1059 = vdwg.mxu0
        %v1060 = vand.u32 %v845, 4294901760
        %1061 = vmatpush.msra.mxu0 %v1060
        %v1062 = vand.u32 %v843, 4294901760
        %1063 = vmatpush.msra.mxu0 %v1062
        %v1064 = vand.u32 %v841, 4294901760
        %1065 = vmatpush.msra.mxu0 %v1064
        %v1066 = vand.u32 %v839, 4294901760
        %1067 = vmatpush.msra.mxu0 %v1066
        %v1068 = vand.u32 %v837, 4294901760
        %1069 = vmatpush.msra.mxu0 %v1068
        %v1070 = vand.u32 %v835, 4294901760
        %1071 = vmatpush.msra.mxu0 %v1070
        %v1072 = vand.u32 %v833, 4294901760
        %1073 = vmatpush.msra.mxu0 %v1072
        %v1074 = vand.u32 %v831, 4294901760
        %1075 = vmatpush.msra.mxu0 %v1074
        %v1076 = vand.u32 %v829, 4294901760
        %1077 = vmatpush.msra.mxu0 %v1076
        %v1078 = vand.u32 %v827, 4294901760
        %1079 = vmatpush.msra.mxu0 %v1078
        %v1080 = vand.u32 %v825, 4294901760
        %1081 = vmatpush.msra.mxu0 %v1080
        %v1082 = vand.u32 %v823, 4294901760
        %1083 = vmatpush.msra.mxu0 %v1082
        %v1084 = vand.u32 %v821, 4294901760
        %1085 = vmatpush.msra.mxu0 %v1084
        %v1086 = vand.u32 %v819, 4294901760
        %1087 = vmatpush.msra.mxu0 %v1086
        %v1088 = vand.u32 %v817, 4294901760
        %1089 = vmatpush.msra.mxu0 %v1088
        %v1090 = vand.u32 %v815, 4294901760
        %1091 = vmatpush.msra.mxu0 %v1090
        %v1092 = vand.u32 %v774, 4294901760
        %v1093 = vsub.f32 %v774, %v1092
        %v1094 = vand.u32 %v1093, 4294901760
        %1095 = vmatmul.f32.gmra.mxu0 %v1094
        %v1096 = vpop.f32.mrf.mxu0
        %v1097 = vadd.f32 %v1053, %v1096
        %v1098 = vand.u32 %v778, 4294901760
        %v1099 = vsub.f32 %v778, %v1098
        %v1100 = vand.u32 %v1099, 4294901760
        %1101 = vmatmul.f32.gmra.mxu0 %v1100
        %v1102 = vpop.f32.mrf.mxu0
        %v1103 = vadd.f32 %v1058, %v1102
        %1104 = vdwg.mxu0
        %v1105 = vand.u32 %v845, 4294901760
        %v1106 = vsub.f32 %v845, %v1105
        %v1107 = vand.u32 %v1106, 4294901760
        %1108 = vmatpush.msra.mxu0 %v1107
        %v1109 = vand.u32 %v843, 4294901760
        %v1110 = vsub.f32 %v843, %v1109
        %v1111 = vand.u32 %v1110, 4294901760
        %1112 = vmatpush.msra.mxu0 %v1111
        %v1113 = vand.u32 %v841, 4294901760
        %v1114 = vsub.f32 %v841, %v1113
        %v1115 = vand.u32 %v1114, 4294901760
        %1116 = vmatpush.msra.mxu0 %v1115
        %v1117 = vand.u32 %v839, 4294901760
        %v1118 = vsub.f32 %v839, %v1117
        %v1119 = vand.u32 %v1118, 4294901760
        %1120 = vmatpush.msra.mxu0 %v1119
        %v1121 = vand.u32 %v837, 4294901760
        %v1122 = vsub.f32 %v837, %v1121
        %v1123 = vand.u32 %v1122, 4294901760
        %1124 = vmatpush.msra.mxu0 %v1123
        %v1125 = vand.u32 %v835, 4294901760
        %v1126 = vsub.f32 %v835, %v1125
        %v1127 = vand.u32 %v1126, 4294901760
        %1128 = vmatpush.msra.mxu0 %v1127
        %v1129 = vand.u32 %v833, 4294901760
        %v1130 = vsub.f32 %v833, %v1129
        %v1131 = vand.u32 %v1130, 4294901760
        %1132 = vmatpush.msra.mxu0 %v1131
        %v1133 = vand.u32 %v831, 4294901760
        %v1134 = vsub.f32 %v831, %v1133
        %v1135 = vand.u32 %v1134, 4294901760
        %1136 = vmatpush.msra.mxu0 %v1135
        %v1137 = vand.u32 %v829, 4294901760
        %v1138 = vsub.f32 %v829, %v1137
        %v1139 = vand.u32 %v1138, 4294901760
        %1140 = vmatpush.msra.mxu0 %v1139
        %v1141 = vand.u32 %v827, 4294901760
        %v1142 = vsub.f32 %v827, %v1141
        %v1143 = vand.u32 %v1142, 4294901760
        %1144 = vmatpush.msra.mxu0 %v1143
        %v1145 = vand.u32 %v825, 4294901760
        %v1146 = vsub.f32 %v825, %v1145
        %v1147 = vand.u32 %v1146, 4294901760
        %1148 = vmatpush.msra.mxu0 %v1147
        %v1149 = vand.u32 %v823, 4294901760
        %v1150 = vsub.f32 %v823, %v1149
        %v1151 = vand.u32 %v1150, 4294901760
        %1152 = vmatpush.msra.mxu0 %v1151
        %v1153 = vand.u32 %v821, 4294901760
        %v1154 = vsub.f32 %v821, %v1153
        %v1155 = vand.u32 %v1154, 4294901760
        %1156 = vmatpush.msra.mxu0 %v1155
        %v1157 = vand.u32 %v819, 4294901760
        %v1158 = vsub.f32 %v819, %v1157
        %v1159 = vand.u32 %v1158, 4294901760
        %1160 = vmatpush.msra.mxu0 %v1159
        %v1161 = vand.u32 %v817, 4294901760
        %v1162 = vsub.f32 %v817, %v1161
        %v1163 = vand.u32 %v1162, 4294901760
        %1164 = vmatpush.msra.mxu0 %v1163
        %v1165 = vand.u32 %v815, 4294901760
        %v1166 = vsub.f32 %v815, %v1165
        %v1167 = vand.u32 %v1166, 4294901760
        %1168 = vmatpush.msra.mxu0 %v1167
        %v1169 = vand.u32 %v774, 4294901760
        %1170 = vmatmul.f32.gmra.mxu0 %v1169
        %v1171 = vpop.f32.mrf.mxu0
        %v1172 = vadd.f32 %v1097, %v1171
        %v1173 = vand.u32 %v778, 4294901760
        %1174 = vmatmul.f32.gmra.mxu0 %v1173
        %v1175 = vpop.f32.mrf.mxu0
        %v1176 = vadd.f32 %v1103, %v1175
        %1177 = vdwg.mxu0
        %v1178 = vand.u32 %v845, 4294901760
        %1179 = vmatpush.msra.mxu0 %v1178
        %v1180 = vand.u32 %v843, 4294901760
        %1181 = vmatpush.msra.mxu0 %v1180
        %v1182 = vand.u32 %v841, 4294901760
        %1183 = vmatpush.msra.mxu0 %v1182
        %v1184 = vand.u32 %v839, 4294901760
        %1185 = vmatpush.msra.mxu0 %v1184
        %v1186 = vand.u32 %v837, 4294901760
        %1187 = vmatpush.msra.mxu0 %v1186
        %v1188 = vand.u32 %v835, 4294901760
        %1189 = vmatpush.msra.mxu0 %v1188
        %v1190 = vand.u32 %v833, 4294901760
        %1191 = vmatpush.msra.mxu0 %v1190
        %v1192 = vand.u32 %v831, 4294901760
        %1193 = vmatpush.msra.mxu0 %v1192
        %v1194 = vand.u32 %v829, 4294901760
        %1195 = vmatpush.msra.mxu0 %v1194
        %v1196 = vand.u32 %v827, 4294901760
        %1197 = vmatpush.msra.mxu0 %v1196
        %v1198 = vand.u32 %v825, 4294901760
        %1199 = vmatpush.msra.mxu0 %v1198
        %v1200 = vand.u32 %v823, 4294901760
        %1201 = vmatpush.msra.mxu0 %v1200
        %v1202 = vand.u32 %v821, 4294901760
        %1203 = vmatpush.msra.mxu0 %v1202
        %v1204 = vand.u32 %v819, 4294901760
        %1205 = vmatpush.msra.mxu0 %v1204
        %v1206 = vand.u32 %v817, 4294901760
        %1207 = vmatpush.msra.mxu0 %v1206
        %v1208 = vand.u32 %v815, 4294901760
        %1209 = vmatpush.msra.mxu0 %v1208
        %v1210 = vand.u32 %v774, 4294901760
        %1211 = vmatmul.f32.gmra.mxu0 %v1210
        %v1212 = vpop.f32.mrf.mxu0
        %v1213 = vadd.f32 %v1172, %v1212
        %v1214 = vand.u32 %v778, 4294901760
        %1215 = vmatmul.f32.gmra.mxu0 %v1214
        %v1216 = vpop.f32.mrf.mxu0
        %v1217 = vadd.f32 %v1176, %v1216
        %1218 = vdwg.mxu0
        %v1219 = vand.u32 %v846, 4294901760
        %1220 = vmatpush.msra.mxu0 %v1219
        %v1221 = vand.u32 %v844, 4294901760
        %1222 = vmatpush.msra.mxu0 %v1221
        %v1223 = vand.u32 %v842, 4294901760
        %1224 = vmatpush.msra.mxu0 %v1223
        %v1225 = vand.u32 %v840, 4294901760
        %1226 = vmatpush.msra.mxu0 %v1225
        %v1227 = vand.u32 %v838, 4294901760
        %1228 = vmatpush.msra.mxu0 %v1227
        %v1229 = vand.u32 %v836, 4294901760
        %1230 = vmatpush.msra.mxu0 %v1229
        %v1231 = vand.u32 %v834, 4294901760
        %1232 = vmatpush.msra.mxu0 %v1231
        %v1233 = vand.u32 %v832, 4294901760
        %1234 = vmatpush.msra.mxu0 %v1233
        %v1235 = vand.u32 %v830, 4294901760
        %1236 = vmatpush.msra.mxu0 %v1235
        %v1237 = vand.u32 %v828, 4294901760
        %1238 = vmatpush.msra.mxu0 %v1237
        %v1239 = vand.u32 %v826, 4294901760
        %1240 = vmatpush.msra.mxu0 %v1239
        %v1241 = vand.u32 %v824, 4294901760
        %1242 = vmatpush.msra.mxu0 %v1241
        %v1243 = vand.u32 %v822, 4294901760
        %1244 = vmatpush.msra.mxu0 %v1243
        %v1245 = vand.u32 %v820, 4294901760
        %1246 = vmatpush.msra.mxu0 %v1245
        %v1247 = vand.u32 %v818, 4294901760
        %1248 = vmatpush.msra.mxu0 %v1247
        %v1249 = vand.u32 %v816, 4294901760
        %1250 = vmatpush.msra.mxu0 %v1249
        %v1251 = vand.u32 %v774, 4294901760
        %v1252 = vsub.f32 %v774, %v1251
        %v1253 = vand.u32 %v1252, 4294901760
        %v1254 = vsub.f32 %v1252, %v1253
        %v1255 = vand.u32 %v1254, 4294901760
        %1256 = vmatmul.f32.gmra.mxu0 %v1255
        %v1257 = vpop.f32.mrf.mxu0
        %v1258 = vadd.f32 0.0, %v1257
        %v1259 = vand.u32 %v778, 4294901760
        %v1260 = vsub.f32 %v778, %v1259
        %v1261 = vand.u32 %v1260, 4294901760
        %v1262 = vsub.f32 %v1260, %v1261
        %v1263 = vand.u32 %v1262, 4294901760
        %1264 = vmatmul.f32.gmra.mxu0 %v1263
        %v1265 = vpop.f32.mrf.mxu0
        %v1266 = vadd.f32 0.0, %v1265
        %1267 = vdwg.mxu0
        %v1268 = vand.u32 %v846, 4294901760
        %v1269 = vsub.f32 %v846, %v1268
        %v1270 = vand.u32 %v1269, 4294901760
        %v1271 = vsub.f32 %v1269, %v1270
        %v1272 = vand.u32 %v1271, 4294901760
        %1273 = vmatpush.msra.mxu0 %v1272
        %v1274 = vand.u32 %v844, 4294901760
        %v1275 = vsub.f32 %v844, %v1274
        %v1276 = vand.u32 %v1275, 4294901760
        %v1277 = vsub.f32 %v1275, %v1276
        %v1278 = vand.u32 %v1277, 4294901760
        %1279 = vmatpush.msra.mxu0 %v1278
        %v1280 = vand.u32 %v842, 4294901760
        %v1281 = vsub.f32 %v842, %v1280
        %v1282 = vand.u32 %v1281, 4294901760
        %v1283 = vsub.f32 %v1281, %v1282
        %v1284 = vand.u32 %v1283, 4294901760
        %1285 = vmatpush.msra.mxu0 %v1284
        %v1286 = vand.u32 %v840, 4294901760
        %v1287 = vsub.f32 %v840, %v1286
        %v1288 = vand.u32 %v1287, 4294901760
        %v1289 = vsub.f32 %v1287, %v1288
        %v1290 = vand.u32 %v1289, 4294901760
        %1291 = vmatpush.msra.mxu0 %v1290
        %v1292 = vand.u32 %v838, 4294901760
        %v1293 = vsub.f32 %v838, %v1292
        %v1294 = vand.u32 %v1293, 4294901760
        %v1295 = vsub.f32 %v1293, %v1294
        %v1296 = vand.u32 %v1295, 4294901760
        %1297 = vmatpush.msra.mxu0 %v1296
        %v1298 = vand.u32 %v836, 4294901760
        %v1299 = vsub.f32 %v836, %v1298
        %v1300 = vand.u32 %v1299, 4294901760
        %v1301 = vsub.f32 %v1299, %v1300
        %v1302 = vand.u32 %v1301, 4294901760
        %1303 = vmatpush.msra.mxu0 %v1302
        %v1304 = vand.u32 %v834, 4294901760
        %v1305 = vsub.f32 %v834, %v1304
        %v1306 = vand.u32 %v1305, 4294901760
        %v1307 = vsub.f32 %v1305, %v1306
        %v1308 = vand.u32 %v1307, 4294901760
        %1309 = vmatpush.msra.mxu0 %v1308
        %v1310 = vand.u32 %v832, 4294901760
        %v1311 = vsub.f32 %v832, %v1310
        %v1312 = vand.u32 %v1311, 4294901760
        %v1313 = vsub.f32 %v1311, %v1312
        %v1314 = vand.u32 %v1313, 4294901760
        %1315 = vmatpush.msra.mxu0 %v1314
        %v1316 = vand.u32 %v830, 4294901760
        %v1317 = vsub.f32 %v830, %v1316
        %v1318 = vand.u32 %v1317, 4294901760
        %v1319 = vsub.f32 %v1317, %v1318
        %v1320 = vand.u32 %v1319, 4294901760
        %1321 = vmatpush.msra.mxu0 %v1320
        %v1322 = vand.u32 %v828, 4294901760
        %v1323 = vsub.f32 %v828, %v1322
        %v1324 = vand.u32 %v1323, 4294901760
        %v1325 = vsub.f32 %v1323, %v1324
        %v1326 = vand.u32 %v1325, 4294901760
        %1327 = vmatpush.msra.mxu0 %v1326
        %v1328 = vand.u32 %v826, 4294901760
        %v1329 = vsub.f32 %v826, %v1328
        %v1330 = vand.u32 %v1329, 4294901760
        %v1331 = vsub.f32 %v1329, %v1330
        %v1332 = vand.u32 %v1331, 4294901760
        %1333 = vmatpush.msra.mxu0 %v1332
        %v1334 = vand.u32 %v824, 4294901760
        %v1335 = vsub.f32 %v824, %v1334
        %v1336 = vand.u32 %v1335, 4294901760
        %v1337 = vsub.f32 %v1335, %v1336
        %v1338 = vand.u32 %v1337, 4294901760
        %1339 = vmatpush.msra.mxu0 %v1338
        %v1340 = vand.u32 %v822, 4294901760
        %v1341 = vsub.f32 %v822, %v1340
        %v1342 = vand.u32 %v1341, 4294901760
        %v1343 = vsub.f32 %v1341, %v1342
        %v1344 = vand.u32 %v1343, 4294901760
        %1345 = vmatpush.msra.mxu0 %v1344
        %v1346 = vand.u32 %v820, 4294901760
        %v1347 = vsub.f32 %v820, %v1346
        %v1348 = vand.u32 %v1347, 4294901760
        %v1349 = vsub.f32 %v1347, %v1348
        %v1350 = vand.u32 %v1349, 4294901760
        %1351 = vmatpush.msra.mxu0 %v1350
        %v1352 = vand.u32 %v818, 4294901760
        %v1353 = vsub.f32 %v818, %v1352
        %v1354 = vand.u32 %v1353, 4294901760
        %v1355 = vsub.f32 %v1353, %v1354
        %v1356 = vand.u32 %v1355, 4294901760
        %1357 = vmatpush.msra.mxu0 %v1356
        %v1358 = vand.u32 %v816, 4294901760
        %v1359 = vsub.f32 %v816, %v1358
        %v1360 = vand.u32 %v1359, 4294901760
        %v1361 = vsub.f32 %v1359, %v1360
        %v1362 = vand.u32 %v1361, 4294901760
        %1363 = vmatpush.msra.mxu0 %v1362
        %v1364 = vand.u32 %v774, 4294901760
        %1365 = vmatmul.f32.gmra.mxu0 %v1364
        %v1366 = vpop.f32.mrf.mxu0
        %v1367 = vadd.f32 %v1258, %v1366
        %v1368 = vand.u32 %v778, 4294901760
        %1369 = vmatmul.f32.gmra.mxu0 %v1368
        %v1370 = vpop.f32.mrf.mxu0
        %v1371 = vadd.f32 %v1266, %v1370
        %1372 = vdwg.mxu0
        %v1373 = vand.u32 %v846, 4294901760
        %v1374 = vsub.f32 %v846, %v1373
        %1375 = vmatpush.msra.mxu0 %v1374
        %v1376 = vand.u32 %v844, 4294901760
        %v1377 = vsub.f32 %v844, %v1376
        %1378 = vmatpush.msra.mxu0 %v1377
        %v1379 = vand.u32 %v842, 4294901760
        %v1380 = vsub.f32 %v842, %v1379
        %1381 = vmatpush.msra.mxu0 %v1380
        %v1382 = vand.u32 %v840, 4294901760
        %v1383 = vsub.f32 %v840, %v1382
        %1384 = vmatpush.msra.mxu0 %v1383
        %v1385 = vand.u32 %v838, 4294901760
        %v1386 = vsub.f32 %v838, %v1385
        %1387 = vmatpush.msra.mxu0 %v1386
        %v1388 = vand.u32 %v836, 4294901760
        %v1389 = vsub.f32 %v836, %v1388
        %1390 = vmatpush.msra.mxu0 %v1389
        %v1391 = vand.u32 %v834, 4294901760
        %v1392 = vsub.f32 %v834, %v1391
        %1393 = vmatpush.msra.mxu0 %v1392
        %v1394 = vand.u32 %v832, 4294901760
        %v1395 = vsub.f32 %v832, %v1394
        %1396 = vmatpush.msra.mxu0 %v1395
        %v1397 = vand.u32 %v830, 4294901760
        %v1398 = vsub.f32 %v830, %v1397
        %1399 = vmatpush.msra.mxu0 %v1398
        %v1400 = vand.u32 %v828, 4294901760
        %v1401 = vsub.f32 %v828, %v1400
        %1402 = vmatpush.msra.mxu0 %v1401
        %v1403 = vand.u32 %v826, 4294901760
        %v1404 = vsub.f32 %v826, %v1403
        %1405 = vmatpush.msra.mxu0 %v1404
        %v1406 = vand.u32 %v824, 4294901760
        %v1407 = vsub.f32 %v824, %v1406
        %1408 = vmatpush.msra.mxu0 %v1407
        %v1409 = vand.u32 %v822, 4294901760
        %v1410 = vsub.f32 %v822, %v1409
        %1411 = vmatpush.msra.mxu0 %v1410
        %v1412 = vand.u32 %v820, 4294901760
        %v1413 = vsub.f32 %v820, %v1412
        %1414 = vmatpush.msra.mxu0 %v1413
        %v1415 = vand.u32 %v818, 4294901760
        %v1416 = vsub.f32 %v818, %v1415
        %1417 = vmatpush.msra.mxu0 %v1416
        %v1418 = vand.u32 %v816, 4294901760
        %v1419 = vsub.f32 %v816, %v1418
        %1420 = vmatpush.msra.mxu0 %v1419
        %v1421 = vand.u32 %v774, 4294901760
        %v1422 = vsub.f32 %v774, %v1421
        %1423 = vmatmul.f32.gmra.mxu0 %v1422
        %v1424 = vpop.f32.mrf.mxu0
        %v1425 = vadd.f32 %v1367, %v1424
        %v1426 = vand.u32 %v778, 4294901760
        %v1427 = vsub.f32 %v778, %v1426
        %1428 = vmatmul.f32.gmra.mxu0 %v1427
        %v1429 = vpop.f32.mrf.mxu0
        %v1430 = vadd.f32 %v1371, %v1429
        %1431 = vdwg.mxu0
        %v1432 = vand.u32 %v846, 4294901760
        %1433 = vmatpush.msra.mxu0 %v1432
        %v1434 = vand.u32 %v844, 4294901760
        %1435 = vmatpush.msra.mxu0 %v1434
        %v1436 = vand.u32 %v842, 4294901760
        %1437 = vmatpush.msra.mxu0 %v1436
        %v1438 = vand.u32 %v840, 4294901760
        %1439 = vmatpush.msra.mxu0 %v1438
        %v1440 = vand.u32 %v838, 4294901760
        %1441 = vmatpush.msra.mxu0 %v1440
        %v1442 = vand.u32 %v836, 4294901760
        %1443 = vmatpush.msra.mxu0 %v1442
        %v1444 = vand.u32 %v834, 4294901760
        %1445 = vmatpush.msra.mxu0 %v1444
        %v1446 = vand.u32 %v832, 4294901760
        %1447 = vmatpush.msra.mxu0 %v1446
        %v1448 = vand.u32 %v830, 4294901760
        %1449 = vmatpush.msra.mxu0 %v1448
        %v1450 = vand.u32 %v828, 4294901760
        %1451 = vmatpush.msra.mxu0 %v1450
        %v1452 = vand.u32 %v826, 4294901760
        %1453 = vmatpush.msra.mxu0 %v1452
        %v1454 = vand.u32 %v824, 4294901760
        %1455 = vmatpush.msra.mxu0 %v1454
        %v1456 = vand.u32 %v822, 4294901760
        %1457 = vmatpush.msra.mxu0 %v1456
        %v1458 = vand.u32 %v820, 4294901760
        %1459 = vmatpush.msra.mxu0 %v1458
        %v1460 = vand.u32 %v818, 4294901760
        %1461 = vmatpush.msra.mxu0 %v1460
        %v1462 = vand.u32 %v816, 4294901760
        %1463 = vmatpush.msra.mxu0 %v1462
        %v1464 = vand.u32 %v774, 4294901760
        %v1465 = vsub.f32 %v774, %v1464
        %v1466 = vand.u32 %v1465, 4294901760
        %1467 = vmatmul.f32.gmra.mxu0 %v1466
        %v1468 = vpop.f32.mrf.mxu0
        %v1469 = vadd.f32 %v1425, %v1468
        %v1470 = vand.u32 %v778, 4294901760
        %v1471 = vsub.f32 %v778, %v1470
        %v1472 = vand.u32 %v1471, 4294901760
        %1473 = vmatmul.f32.gmra.mxu0 %v1472
        %v1474 = vpop.f32.mrf.mxu0
        %v1475 = vadd.f32 %v1430, %v1474
        %1476 = vdwg.mxu0
        %v1477 = vand.u32 %v846, 4294901760
        %v1478 = vsub.f32 %v846, %v1477
        %v1479 = vand.u32 %v1478, 4294901760
        %1480 = vmatpush.msra.mxu0 %v1479
        %v1481 = vand.u32 %v844, 4294901760
        %v1482 = vsub.f32 %v844, %v1481
        %v1483 = vand.u32 %v1482, 4294901760
        %1484 = vmatpush.msra.mxu0 %v1483
        %v1485 = vand.u32 %v842, 4294901760
        %v1486 = vsub.f32 %v842, %v1485
        %v1487 = vand.u32 %v1486, 4294901760
        %1488 = vmatpush.msra.mxu0 %v1487
        %v1489 = vand.u32 %v840, 4294901760
        %v1490 = vsub.f32 %v840, %v1489
        %v1491 = vand.u32 %v1490, 4294901760
        %1492 = vmatpush.msra.mxu0 %v1491
        %v1493 = vand.u32 %v838, 4294901760
        %v1494 = vsub.f32 %v838, %v1493
        %v1495 = vand.u32 %v1494, 4294901760
        %1496 = vmatpush.msra.mxu0 %v1495
        %v1497 = vand.u32 %v836, 4294901760
        %v1498 = vsub.f32 %v836, %v1497
        %v1499 = vand.u32 %v1498, 4294901760
        %1500 = vmatpush.msra.mxu0 %v1499
        %v1501 = vand.u32 %v834, 4294901760
        %v1502 = vsub.f32 %v834, %v1501
        %v1503 = vand.u32 %v1502, 4294901760
        %1504 = vmatpush.msra.mxu0 %v1503
        %v1505 = vand.u32 %v832, 4294901760
        %v1506 = vsub.f32 %v832, %v1505
        %v1507 = vand.u32 %v1506, 4294901760
        %1508 = vmatpush.msra.mxu0 %v1507
        %v1509 = vand.u32 %v830, 4294901760
        %v1510 = vsub.f32 %v830, %v1509
        %v1511 = vand.u32 %v1510, 4294901760
        %1512 = vmatpush.msra.mxu0 %v1511
        %v1513 = vand.u32 %v828, 4294901760
        %v1514 = vsub.f32 %v828, %v1513
        %v1515 = vand.u32 %v1514, 4294901760
        %1516 = vmatpush.msra.mxu0 %v1515
        %v1517 = vand.u32 %v826, 4294901760
        %v1518 = vsub.f32 %v826, %v1517
        %v1519 = vand.u32 %v1518, 4294901760
        %1520 = vmatpush.msra.mxu0 %v1519
        %v1521 = vand.u32 %v824, 4294901760
        %v1522 = vsub.f32 %v824, %v1521
        %v1523 = vand.u32 %v1522, 4294901760
        %1524 = vmatpush.msra.mxu0 %v1523
        %v1525 = vand.u32 %v822, 4294901760
        %v1526 = vsub.f32 %v822, %v1525
        %v1527 = vand.u32 %v1526, 4294901760
        %1528 = vmatpush.msra.mxu0 %v1527
        %v1529 = vand.u32 %v820, 4294901760
        %v1530 = vsub.f32 %v820, %v1529
        %v1531 = vand.u32 %v1530, 4294901760
        %1532 = vmatpush.msra.mxu0 %v1531
        %v1533 = vand.u32 %v818, 4294901760
        %v1534 = vsub.f32 %v818, %v1533
        %v1535 = vand.u32 %v1534, 4294901760
        %1536 = vmatpush.msra.mxu0 %v1535
        %v1537 = vand.u32 %v816, 4294901760
        %v1538 = vsub.f32 %v816, %v1537
        %v1539 = vand.u32 %v1538, 4294901760
        %1540 = vmatpush.msra.mxu0 %v1539
        %v1541 = vand.u32 %v774, 4294901760
        %1542 = vmatmul.f32.gmra.mxu0 %v1541
        %v1543 = vpop.f32.mrf.mxu0
        %v1544 = vadd.f32 %v1469, %v1543
        %v1545 = vand.u32 %v778, 4294901760
        %1546 = vmatmul.f32.gmra.mxu0 %v1545
        %v1547 = vpop.f32.mrf.mxu0
        %v1548 = vadd.f32 %v1475, %v1547
        %1549 = vdwg.mxu0
        %v1550 = vand.u32 %v846, 4294901760
        %1551 = vmatpush.msra.mxu0 %v1550
        %v1552 = vand.u32 %v844, 4294901760
        %1553 = vmatpush.msra.mxu0 %v1552
        %v1554 = vand.u32 %v842, 4294901760
        %1555 = vmatpush.msra.mxu0 %v1554
        %v1556 = vand.u32 %v840, 4294901760
        %1557 = vmatpush.msra.mxu0 %v1556
        %v1558 = vand.u32 %v838, 4294901760
        %1559 = vmatpush.msra.mxu0 %v1558
        %v1560 = vand.u32 %v836, 4294901760
        %1561 = vmatpush.msra.mxu0 %v1560
        %v1562 = vand.u32 %v834, 4294901760
        %1563 = vmatpush.msra.mxu0 %v1562
        %v1564 = vand.u32 %v832, 4294901760
        %1565 = vmatpush.msra.mxu0 %v1564
        %v1566 = vand.u32 %v830, 4294901760
        %1567 = vmatpush.msra.mxu0 %v1566
        %v1568 = vand.u32 %v828, 4294901760
        %1569 = vmatpush.msra.mxu0 %v1568
        %v1570 = vand.u32 %v826, 4294901760
        %1571 = vmatpush.msra.mxu0 %v1570
        %v1572 = vand.u32 %v824, 4294901760
        %1573 = vmatpush.msra.mxu0 %v1572
        %v1574 = vand.u32 %v822, 4294901760
        %1575 = vmatpush.msra.mxu0 %v1574
        %v1576 = vand.u32 %v820, 4294901760
        %1577 = vmatpush.msra.mxu0 %v1576
        %v1578 = vand.u32 %v818, 4294901760
        %1579 = vmatpush.msra.mxu0 %v1578
        %v1580 = vand.u32 %v816, 4294901760
        %1581 = vmatpush.msra.mxu0 %v1580
        %v1582 = vand.u32 %v774, 4294901760
        %1583 = vmatmul.f32.gmra.mxu0 %v1582
        %v1584 = vpop.f32.mrf.mxu0
        %v1585 = vadd.f32 %v1544, %v1584
        %v1586 = vand.u32 %v778, 4294901760
        %1587 = vmatmul.f32.gmra.mxu0 %v1586
        %v1588 = vpop.f32.mrf.mxu0
        %v1589 = vadd.f32 %v1548, %v1588
        %1590 = vdwg.mxu0
        %v1591 = vand.u32 %v812, 4294901760
        %1592 = vmatpush.msra.mxu0 %v1591
        %v1593 = vand.u32 %v810, 4294901760
        %1594 = vmatpush.msra.mxu0 %v1593
        %v1595 = vand.u32 %v808, 4294901760
        %1596 = vmatpush.msra.mxu0 %v1595
        %v1597 = vand.u32 %v806, 4294901760
        %1598 = vmatpush.msra.mxu0 %v1597
        %v1599 = vand.u32 %v804, 4294901760
        %1600 = vmatpush.msra.mxu0 %v1599
        %v1601 = vand.u32 %v802, 4294901760
        %1602 = vmatpush.msra.mxu0 %v1601
        %v1603 = vand.u32 %v800, 4294901760
        %1604 = vmatpush.msra.mxu0 %v1603
        %v1605 = vand.u32 %v798, 4294901760
        %1606 = vmatpush.msra.mxu0 %v1605
        %v1607 = vand.u32 %v796, 4294901760
        %1608 = vmatpush.msra.mxu0 %v1607
        %v1609 = vand.u32 %v794, 4294901760
        %1610 = vmatpush.msra.mxu0 %v1609
        %v1611 = vand.u32 %v792, 4294901760
        %1612 = vmatpush.msra.mxu0 %v1611
        %v1613 = vand.u32 %v790, 4294901760
        %1614 = vmatpush.msra.mxu0 %v1613
        %v1615 = vand.u32 %v788, 4294901760
        %1616 = vmatpush.msra.mxu0 %v1615
        %v1617 = vand.u32 %v786, 4294901760
        %1618 = vmatpush.msra.mxu0 %v1617
        %v1619 = vand.u32 %v784, 4294901760
        %1620 = vmatpush.msra.mxu0 %v1619
        %v1621 = vand.u32 %v782, 4294901760
        %1622 = vmatpush.msra.mxu0 %v1621
        %v1623 = vand.u32 %v766, 4294901760
        %v1624 = vsub.f32 %v766, %v1623
        %v1625 = vand.u32 %v1624, 4294901760
        %v1626 = vsub.f32 %v1624, %v1625
        %v1627 = vand.u32 %v1626, 4294901760
        %1628 = vmatmul.f32.gmra.mxu0 %v1627
        %v1629 = vpop.f32.mrf.mxu0
        %v1630 = vadd.f32 %v1213, %v1629
        %v1631 = vand.u32 %v770, 4294901760
        %v1632 = vsub.f32 %v770, %v1631
        %v1633 = vand.u32 %v1632, 4294901760
        %v1634 = vsub.f32 %v1632, %v1633
        %v1635 = vand.u32 %v1634, 4294901760
        %1636 = vmatmul.f32.gmra.mxu0 %v1635
        %v1637 = vpop.f32.mrf.mxu0
        %v1638 = vadd.f32 %v1217, %v1637
        %1639 = vdwg.mxu0
        %v1640 = vand.u32 %v812, 4294901760
        %v1641 = vsub.f32 %v812, %v1640
        %v1642 = vand.u32 %v1641, 4294901760
        %v1643 = vsub.f32 %v1641, %v1642
        %v1644 = vand.u32 %v1643, 4294901760
        %1645 = vmatpush.msra.mxu0 %v1644
        %v1646 = vand.u32 %v810, 4294901760
        %v1647 = vsub.f32 %v810, %v1646
        %v1648 = vand.u32 %v1647, 4294901760
        %v1649 = vsub.f32 %v1647, %v1648
        %v1650 = vand.u32 %v1649, 4294901760
        %1651 = vmatpush.msra.mxu0 %v1650
        %v1652 = vand.u32 %v808, 4294901760
        %v1653 = vsub.f32 %v808, %v1652
        %v1654 = vand.u32 %v1653, 4294901760
        %v1655 = vsub.f32 %v1653, %v1654
        %v1656 = vand.u32 %v1655, 4294901760
        %1657 = vmatpush.msra.mxu0 %v1656
        %v1658 = vand.u32 %v806, 4294901760
        %v1659 = vsub.f32 %v806, %v1658
        %v1660 = vand.u32 %v1659, 4294901760
        %v1661 = vsub.f32 %v1659, %v1660
        %v1662 = vand.u32 %v1661, 4294901760
        %1663 = vmatpush.msra.mxu0 %v1662
        %v1664 = vand.u32 %v804, 4294901760
        %v1665 = vsub.f32 %v804, %v1664
        %v1666 = vand.u32 %v1665, 4294901760
        %v1667 = vsub.f32 %v1665, %v1666
        %v1668 = vand.u32 %v1667, 4294901760
        %1669 = vmatpush.msra.mxu0 %v1668
        %v1670 = vand.u32 %v802, 4294901760
        %v1671 = vsub.f32 %v802, %v1670
        %v1672 = vand.u32 %v1671, 4294901760
        %v1673 = vsub.f32 %v1671, %v1672
        %v1674 = vand.u32 %v1673, 4294901760
        %1675 = vmatpush.msra.mxu0 %v1674
        %v1676 = vand.u32 %v800, 4294901760
        %v1677 = vsub.f32 %v800, %v1676
        %v1678 = vand.u32 %v1677, 4294901760
        %v1679 = vsub.f32 %v1677, %v1678
        %v1680 = vand.u32 %v1679, 4294901760
        %1681 = vmatpush.msra.mxu0 %v1680
        %v1682 = vand.u32 %v798, 4294901760
        %v1683 = vsub.f32 %v798, %v1682
        %v1684 = vand.u32 %v1683, 4294901760
        %v1685 = vsub.f32 %v1683, %v1684
        %v1686 = vand.u32 %v1685, 4294901760
        %1687 = vmatpush.msra.mxu0 %v1686
        %v1688 = vand.u32 %v796, 4294901760
        %v1689 = vsub.f32 %v796, %v1688
        %v1690 = vand.u32 %v1689, 4294901760
        %v1691 = vsub.f32 %v1689, %v1690
        %v1692 = vand.u32 %v1691, 4294901760
        %1693 = vmatpush.msra.mxu0 %v1692
        %v1694 = vand.u32 %v794, 4294901760
        %v1695 = vsub.f32 %v794, %v1694
        %v1696 = vand.u32 %v1695, 4294901760
        %v1697 = vsub.f32 %v1695, %v1696
        %v1698 = vand.u32 %v1697, 4294901760
        %1699 = vmatpush.msra.mxu0 %v1698
        %v1700 = vand.u32 %v792, 4294901760
        %v1701 = vsub.f32 %v792, %v1700
        %v1702 = vand.u32 %v1701, 4294901760
        %v1703 = vsub.f32 %v1701, %v1702
        %v1704 = vand.u32 %v1703, 4294901760
        %1705 = vmatpush.msra.mxu0 %v1704
        %v1706 = vand.u32 %v790, 4294901760
        %v1707 = vsub.f32 %v790, %v1706
        %v1708 = vand.u32 %v1707, 4294901760
        %v1709 = vsub.f32 %v1707, %v1708
        %v1710 = vand.u32 %v1709, 4294901760
        %1711 = vmatpush.msra.mxu0 %v1710
        %v1712 = vand.u32 %v788, 4294901760
        %v1713 = vsub.f32 %v788, %v1712
        %v1714 = vand.u32 %v1713, 4294901760
        %v1715 = vsub.f32 %v1713, %v1714
        %v1716 = vand.u32 %v1715, 4294901760
        %1717 = vmatpush.msra.mxu0 %v1716
        %v1718 = vand.u32 %v786, 4294901760
        %v1719 = vsub.f32 %v786, %v1718
        %v1720 = vand.u32 %v1719, 4294901760
        %v1721 = vsub.f32 %v1719, %v1720
        %v1722 = vand.u32 %v1721, 4294901760
        %1723 = vmatpush.msra.mxu0 %v1722
        %v1724 = vand.u32 %v784, 4294901760
        %v1725 = vsub.f32 %v784, %v1724
        %v1726 = vand.u32 %v1725, 4294901760
        %v1727 = vsub.f32 %v1725, %v1726
        %v1728 = vand.u32 %v1727, 4294901760
        %1729 = vmatpush.msra.mxu0 %v1728
        %v1730 = vand.u32 %v782, 4294901760
        %v1731 = vsub.f32 %v782, %v1730
        %v1732 = vand.u32 %v1731, 4294901760
        %v1733 = vsub.f32 %v1731, %v1732
        %v1734 = vand.u32 %v1733, 4294901760
        %1735 = vmatpush.msra.mxu0 %v1734
        %v1736 = vand.u32 %v766, 4294901760
        %1737 = vmatmul.f32.gmra.mxu0 %v1736
        %v1738 = vpop.f32.mrf.mxu0
        %v1739 = vadd.f32 %v1630, %v1738
        %v1740 = vand.u32 %v770, 4294901760
        %1741 = vmatmul.f32.gmra.mxu0 %v1740
        %v1742 = vpop.f32.mrf.mxu0
        %v1743 = vadd.f32 %v1638, %v1742
        %1744 = vdwg.mxu0
        %v1745 = vand.u32 %v812, 4294901760
        %v1746 = vsub.f32 %v812, %v1745
        %1747 = vmatpush.msra.mxu0 %v1746
        %v1748 = vand.u32 %v810, 4294901760
        %v1749 = vsub.f32 %v810, %v1748
        %1750 = vmatpush.msra.mxu0 %v1749
        %v1751 = vand.u32 %v808, 4294901760
        %v1752 = vsub.f32 %v808, %v1751
        %1753 = vmatpush.msra.mxu0 %v1752
        %v1754 = vand.u32 %v806, 4294901760
        %v1755 = vsub.f32 %v806, %v1754
        %1756 = vmatpush.msra.mxu0 %v1755
        %v1757 = vand.u32 %v804, 4294901760
        %v1758 = vsub.f32 %v804, %v1757
        %1759 = vmatpush.msra.mxu0 %v1758
        %v1760 = vand.u32 %v802, 4294901760
        %v1761 = vsub.f32 %v802, %v1760
        %1762 = vmatpush.msra.mxu0 %v1761
        %v1763 = vand.u32 %v800, 4294901760
        %v1764 = vsub.f32 %v800, %v1763
        %1765 = vmatpush.msra.mxu0 %v1764
        %v1766 = vand.u32 %v798, 4294901760
        %v1767 = vsub.f32 %v798, %v1766
        %1768 = vmatpush.msra.mxu0 %v1767
        %v1769 = vand.u32 %v796, 4294901760
        %v1770 = vsub.f32 %v796, %v1769
        %1771 = vmatpush.msra.mxu0 %v1770
        %v1772 = vand.u32 %v794, 4294901760
        %v1773 = vsub.f32 %v794, %v1772
        %1774 = vmatpush.msra.mxu0 %v1773
        %v1775 = vand.u32 %v792, 4294901760
        %v1776 = vsub.f32 %v792, %v1775
        %1777 = vmatpush.msra.mxu0 %v1776
        %v1778 = vand.u32 %v790, 4294901760
        %v1779 = vsub.f32 %v790, %v1778
        %1780 = vmatpush.msra.mxu0 %v1779
        %v1781 = vand.u32 %v788, 4294901760
        %v1782 = vsub.f32 %v788, %v1781
        %1783 = vmatpush.msra.mxu0 %v1782
        %v1784 = vand.u32 %v786, 4294901760
        %v1785 = vsub.f32 %v786, %v1784
        %1786 = vmatpush.msra.mxu0 %v1785
        %v1787 = vand.u32 %v784, 4294901760
        %v1788 = vsub.f32 %v784, %v1787
        %1789 = vmatpush.msra.mxu0 %v1788
        %v1790 = vand.u32 %v782, 4294901760
        %v1791 = vsub.f32 %v782, %v1790
        %1792 = vmatpush.msra.mxu0 %v1791
        %v1793 = vand.u32 %v766, 4294901760
        %v1794 = vsub.f32 %v766, %v1793
        %1795 = vmatmul.f32.gmra.mxu0 %v1794
        %v1796 = vpop.f32.mrf.mxu0
        %v1797 = vadd.f32 %v1739, %v1796
        %v1798 = vand.u32 %v770, 4294901760
        %v1799 = vsub.f32 %v770, %v1798
        %1800 = vmatmul.f32.gmra.mxu0 %v1799
        %v1801 = vpop.f32.mrf.mxu0
        %v1802 = vadd.f32 %v1743, %v1801
        %1803 = vdwg.mxu0
        %v1804 = vand.u32 %v812, 4294901760
        %1805 = vmatpush.msra.mxu0 %v1804
        %v1806 = vand.u32 %v810, 4294901760
        %1807 = vmatpush.msra.mxu0 %v1806
        %v1808 = vand.u32 %v808, 4294901760
        %1809 = vmatpush.msra.mxu0 %v1808
        %v1810 = vand.u32 %v806, 4294901760
        %1811 = vmatpush.msra.mxu0 %v1810
        %v1812 = vand.u32 %v804, 4294901760
        %1813 = vmatpush.msra.mxu0 %v1812
        %v1814 = vand.u32 %v802, 4294901760
        %1815 = vmatpush.msra.mxu0 %v1814
        %v1816 = vand.u32 %v800, 4294901760
        %1817 = vmatpush.msra.mxu0 %v1816
        %v1818 = vand.u32 %v798, 4294901760
        %1819 = vmatpush.msra.mxu0 %v1818
        %v1820 = vand.u32 %v796, 4294901760
        %1821 = vmatpush.msra.mxu0 %v1820
        %v1822 = vand.u32 %v794, 4294901760
        %1823 = vmatpush.msra.mxu0 %v1822
        %v1824 = vand.u32 %v792, 4294901760
        %1825 = vmatpush.msra.mxu0 %v1824
        %v1826 = vand.u32 %v790, 4294901760
        %1827 = vmatpush.msra.mxu0 %v1826
        %v1828 = vand.u32 %v788, 4294901760
        %1829 = vmatpush.msra.mxu0 %v1828
        %v1830 = vand.u32 %v786, 4294901760
        %1831 = vmatpush.msra.mxu0 %v1830
        %v1832 = vand.u32 %v784, 4294901760
        %1833 = vmatpush.msra.mxu0 %v1832
        %v1834 = vand.u32 %v782, 4294901760
        %1835 = vmatpush.msra.mxu0 %v1834
        %v1836 = vand.u32 %v766, 4294901760
        %v1837 = vsub.f32 %v766, %v1836
        %v1838 = vand.u32 %v1837, 4294901760
        %1839 = vmatmul.f32.gmra.mxu0 %v1838
        %v1840 = vpop.f32.mrf.mxu0
        %v1841 = vadd.f32 %v1797, %v1840
        %v1842 = vand.u32 %v770, 4294901760
        %v1843 = vsub.f32 %v770, %v1842
        %v1844 = vand.u32 %v1843, 4294901760
        %1845 = vmatmul.f32.gmra.mxu0 %v1844
        %v1846 = vpop.f32.mrf.mxu0
        %v1847 = vadd.f32 %v1802, %v1846
        %1848 = vdwg.mxu0
        %v1849 = vand.u32 %v812, 4294901760
        %v1850 = vsub.f32 %v812, %v1849
        %v1851 = vand.u32 %v1850, 4294901760
        %1852 = vmatpush.msra.mxu0 %v1851
        %v1853 = vand.u32 %v810, 4294901760
        %v1854 = vsub.f32 %v810, %v1853
        %v1855 = vand.u32 %v1854, 4294901760
        %1856 = vmatpush.msra.mxu0 %v1855
        %v1857 = vand.u32 %v808, 4294901760
        %v1858 = vsub.f32 %v808, %v1857
        %v1859 = vand.u32 %v1858, 4294901760
        %1860 = vmatpush.msra.mxu0 %v1859
        %v1861 = vand.u32 %v806, 4294901760
        %v1862 = vsub.f32 %v806, %v1861
        %v1863 = vand.u32 %v1862, 4294901760
        %1864 = vmatpush.msra.mxu0 %v1863
        %v1865 = vand.u32 %v804, 4294901760
        %v1866 = vsub.f32 %v804, %v1865
        %v1867 = vand.u32 %v1866, 4294901760
        %1868 = vmatpush.msra.mxu0 %v1867
        %v1869 = vand.u32 %v802, 4294901760
        %v1870 = vsub.f32 %v802, %v1869
        %v1871 = vand.u32 %v1870, 4294901760
        %1872 = vmatpush.msra.mxu0 %v1871
        %v1873 = vand.u32 %v800, 4294901760
        %v1874 = vsub.f32 %v800, %v1873
        %v1875 = vand.u32 %v1874, 4294901760
        %1876 = vmatpush.msra.mxu0 %v1875
        %v1877 = vand.u32 %v798, 4294901760
        %v1878 = vsub.f32 %v798, %v1877
        %v1879 = vand.u32 %v1878, 4294901760
        %1880 = vmatpush.msra.mxu0 %v1879
        %v1881 = vand.u32 %v796, 4294901760
        %v1882 = vsub.f32 %v796, %v1881
        %v1883 = vand.u32 %v1882, 4294901760
        %1884 = vmatpush.msra.mxu0 %v1883
        %v1885 = vand.u32 %v794, 4294901760
        %v1886 = vsub.f32 %v794, %v1885
        %v1887 = vand.u32 %v1886, 4294901760
        %1888 = vmatpush.msra.mxu0 %v1887
        %v1889 = vand.u32 %v792, 4294901760
        %v1890 = vsub.f32 %v792, %v1889
        %v1891 = vand.u32 %v1890, 4294901760
        %1892 = vmatpush.msra.mxu0 %v1891
        %v1893 = vand.u32 %v790, 4294901760
        %v1894 = vsub.f32 %v790, %v1893
        %v1895 = vand.u32 %v1894, 4294901760
        %1896 = vmatpush.msra.mxu0 %v1895
        %v1897 = vand.u32 %v788, 4294901760
        %v1898 = vsub.f32 %v788, %v1897
        %v1899 = vand.u32 %v1898, 4294901760
        %1900 = vmatpush.msra.mxu0 %v1899
        %v1901 = vand.u32 %v786, 4294901760
        %v1902 = vsub.f32 %v786, %v1901
        %v1903 = vand.u32 %v1902, 4294901760
        %1904 = vmatpush.msra.mxu0 %v1903
        %v1905 = vand.u32 %v784, 4294901760
        %v1906 = vsub.f32 %v784, %v1905
        %v1907 = vand.u32 %v1906, 4294901760
        %1908 = vmatpush.msra.mxu0 %v1907
        %v1909 = vand.u32 %v782, 4294901760
        %v1910 = vsub.f32 %v782, %v1909
        %v1911 = vand.u32 %v1910, 4294901760
        %1912 = vmatpush.msra.mxu0 %v1911
        %v1913 = vand.u32 %v766, 4294901760
        %1914 = vmatmul.f32.gmra.mxu0 %v1913
        %v1915 = vpop.f32.mrf.mxu0
        %v1916 = vadd.f32 %v1841, %v1915
        %v1917 = vand.u32 %v770, 4294901760
        %1918 = vmatmul.f32.gmra.mxu0 %v1917
        %v1919 = vpop.f32.mrf.mxu0
        %v1920 = vadd.f32 %v1847, %v1919
        %1921 = vdwg.mxu0
        %v1922 = vand.u32 %v812, 4294901760
        %1923 = vmatpush.msra.mxu0 %v1922
        %v1924 = vand.u32 %v810, 4294901760
        %1925 = vmatpush.msra.mxu0 %v1924
        %v1926 = vand.u32 %v808, 4294901760
        %1927 = vmatpush.msra.mxu0 %v1926
        %v1928 = vand.u32 %v806, 4294901760
        %1929 = vmatpush.msra.mxu0 %v1928
        %v1930 = vand.u32 %v804, 4294901760
        %1931 = vmatpush.msra.mxu0 %v1930
        %v1932 = vand.u32 %v802, 4294901760
        %1933 = vmatpush.msra.mxu0 %v1932
        %v1934 = vand.u32 %v800, 4294901760
        %1935 = vmatpush.msra.mxu0 %v1934
        %v1936 = vand.u32 %v798, 4294901760
        %1937 = vmatpush.msra.mxu0 %v1936
        %v1938 = vand.u32 %v796, 4294901760
        %1939 = vmatpush.msra.mxu0 %v1938
        %v1940 = vand.u32 %v794, 4294901760
        %1941 = vmatpush.msra.mxu0 %v1940
        %v1942 = vand.u32 %v792, 4294901760
        %1943 = vmatpush.msra.mxu0 %v1942
        %v1944 = vand.u32 %v790, 4294901760
        %1945 = vmatpush.msra.mxu0 %v1944
        %v1946 = vand.u32 %v788, 4294901760
        %1947 = vmatpush.msra.mxu0 %v1946
        %v1948 = vand.u32 %v786, 4294901760
        %1949 = vmatpush.msra.mxu0 %v1948
        %v1950 = vand.u32 %v784, 4294901760
        %1951 = vmatpush.msra.mxu0 %v1950
        %v1952 = vand.u32 %v782, 4294901760
        %1953 = vmatpush.msra.mxu0 %v1952
        %v1954 = vand.u32 %v766, 4294901760
        %1955 = vmatmul.f32.gmra.mxu0 %v1954
        %v1956 = vpop.f32.mrf.mxu0
        %v1957 = vadd.f32 %v1916, %v1956
        %v1958 = vand.u32 %v770, 4294901760
        %1959 = vmatmul.f32.gmra.mxu0 %v1958
        %v1960 = vpop.f32.mrf.mxu0
        %v1961 = vadd.f32 %v1920, %v1960
        %1962 = vdwg.mxu0
        %v1963 = vand.u32 %v813, 4294901760
        %1964 = vmatpush.msra.mxu0 %v1963
        %v1965 = vand.u32 %v811, 4294901760
        %1966 = vmatpush.msra.mxu0 %v1965
        %v1967 = vand.u32 %v809, 4294901760
        %1968 = vmatpush.msra.mxu0 %v1967
        %v1969 = vand.u32 %v807, 4294901760
        %1970 = vmatpush.msra.mxu0 %v1969
        %v1971 = vand.u32 %v805, 4294901760
        %1972 = vmatpush.msra.mxu0 %v1971
        %v1973 = vand.u32 %v803, 4294901760
        %1974 = vmatpush.msra.mxu0 %v1973
        %v1975 = vand.u32 %v801, 4294901760
        %1976 = vmatpush.msra.mxu0 %v1975
        %v1977 = vand.u32 %v799, 4294901760
        %1978 = vmatpush.msra.mxu0 %v1977
        %v1979 = vand.u32 %v797, 4294901760
        %1980 = vmatpush.msra.mxu0 %v1979
        %v1981 = vand.u32 %v795, 4294901760
        %1982 = vmatpush.msra.mxu0 %v1981
        %v1983 = vand.u32 %v793, 4294901760
        %1984 = vmatpush.msra.mxu0 %v1983
        %v1985 = vand.u32 %v791, 4294901760
        %1986 = vmatpush.msra.mxu0 %v1985
        %v1987 = vand.u32 %v789, 4294901760
        %1988 = vmatpush.msra.mxu0 %v1987
        %v1989 = vand.u32 %v787, 4294901760
        %1990 = vmatpush.msra.mxu0 %v1989
        %v1991 = vand.u32 %v785, 4294901760
        %1992 = vmatpush.msra.mxu0 %v1991
        %v1993 = vand.u32 %v783, 4294901760
        %1994 = vmatpush.msra.mxu0 %v1993
        %v1995 = vand.u32 %v766, 4294901760
        %v1996 = vsub.f32 %v766, %v1995
        %v1997 = vand.u32 %v1996, 4294901760
        %v1998 = vsub.f32 %v1996, %v1997
        %v1999 = vand.u32 %v1998, 4294901760
        %2000 = vmatmul.f32.gmra.mxu0 %v1999
        %v2001 = vpop.f32.mrf.mxu0
        %v2002 = vadd.f32 %v1585, %v2001
        %v2003 = vand.u32 %v770, 4294901760
        %v2004 = vsub.f32 %v770, %v2003
        %v2005 = vand.u32 %v2004, 4294901760
        %v2006 = vsub.f32 %v2004, %v2005
        %v2007 = vand.u32 %v2006, 4294901760
        %2008 = vmatmul.f32.gmra.mxu0 %v2007
        %v2009 = vpop.f32.mrf.mxu0
        %v2010 = vadd.f32 %v1589, %v2009
        %2011 = vdwg.mxu0
        %v2012 = vand.u32 %v813, 4294901760
        %v2013 = vsub.f32 %v813, %v2012
        %v2014 = vand.u32 %v2013, 4294901760
        %v2015 = vsub.f32 %v2013, %v2014
        %v2016 = vand.u32 %v2015, 4294901760
        %2017 = vmatpush.msra.mxu0 %v2016
        %v2018 = vand.u32 %v811, 4294901760
        %v2019 = vsub.f32 %v811, %v2018
        %v2020 = vand.u32 %v2019, 4294901760
        %v2021 = vsub.f32 %v2019, %v2020
        %v2022 = vand.u32 %v2021, 4294901760
        %2023 = vmatpush.msra.mxu0 %v2022
        %v2024 = vand.u32 %v809, 4294901760
        %v2025 = vsub.f32 %v809, %v2024
        %v2026 = vand.u32 %v2025, 4294901760
        %v2027 = vsub.f32 %v2025, %v2026
        %v2028 = vand.u32 %v2027, 4294901760
        %2029 = vmatpush.msra.mxu0 %v2028
        %v2030 = vand.u32 %v807, 4294901760
        %v2031 = vsub.f32 %v807, %v2030
        %v2032 = vand.u32 %v2031, 4294901760
        %v2033 = vsub.f32 %v2031, %v2032
        %v2034 = vand.u32 %v2033, 4294901760
        %2035 = vmatpush.msra.mxu0 %v2034
        %v2036 = vand.u32 %v805, 4294901760
        %v2037 = vsub.f32 %v805, %v2036
        %v2038 = vand.u32 %v2037, 4294901760
        %v2039 = vsub.f32 %v2037, %v2038
        %v2040 = vand.u32 %v2039, 4294901760
        %2041 = vmatpush.msra.mxu0 %v2040
        %v2042 = vand.u32 %v803, 4294901760
        %v2043 = vsub.f32 %v803, %v2042
        %v2044 = vand.u32 %v2043, 4294901760
        %v2045 = vsub.f32 %v2043, %v2044
        %v2046 = vand.u32 %v2045, 4294901760
        %2047 = vmatpush.msra.mxu0 %v2046
        %v2048 = vand.u32 %v801, 4294901760
        %v2049 = vsub.f32 %v801, %v2048
        %v2050 = vand.u32 %v2049, 4294901760
        %v2051 = vsub.f32 %v2049, %v2050
        %v2052 = vand.u32 %v2051, 4294901760
        %2053 = vmatpush.msra.mxu0 %v2052
        %v2054 = vand.u32 %v799, 4294901760
        %v2055 = vsub.f32 %v799, %v2054
        %v2056 = vand.u32 %v2055, 4294901760
        %v2057 = vsub.f32 %v2055, %v2056
        %v2058 = vand.u32 %v2057, 4294901760
        %2059 = vmatpush.msra.mxu0 %v2058
        %v2060 = vand.u32 %v797, 4294901760
        %v2061 = vsub.f32 %v797, %v2060
        %v2062 = vand.u32 %v2061, 4294901760
        %v2063 = vsub.f32 %v2061, %v2062
        %v2064 = vand.u32 %v2063, 4294901760
        %2065 = vmatpush.msra.mxu0 %v2064
        %v2066 = vand.u32 %v795, 4294901760
        %v2067 = vsub.f32 %v795, %v2066
        %v2068 = vand.u32 %v2067, 4294901760
        %v2069 = vsub.f32 %v2067, %v2068
        %v2070 = vand.u32 %v2069, 4294901760
        %2071 = vmatpush.msra.mxu0 %v2070
        %v2072 = vand.u32 %v793, 4294901760
        %v2073 = vsub.f32 %v793, %v2072
        %v2074 = vand.u32 %v2073, 4294901760
        %v2075 = vsub.f32 %v2073, %v2074
        %v2076 = vand.u32 %v2075, 4294901760
        %2077 = vmatpush.msra.mxu0 %v2076
        %v2078 = vand.u32 %v791, 4294901760
        %v2079 = vsub.f32 %v791, %v2078
        %v2080 = vand.u32 %v2079, 4294901760
        %v2081 = vsub.f32 %v2079, %v2080
        %v2082 = vand.u32 %v2081, 4294901760
        %2083 = vmatpush.msra.mxu0 %v2082
        %v2084 = vand.u32 %v789, 4294901760
        %v2085 = vsub.f32 %v789, %v2084
        %v2086 = vand.u32 %v2085, 4294901760
        %v2087 = vsub.f32 %v2085, %v2086
        %v2088 = vand.u32 %v2087, 4294901760
        %2089 = vmatpush.msra.mxu0 %v2088
        %v2090 = vand.u32 %v787, 4294901760
        %v2091 = vsub.f32 %v787, %v2090
        %v2092 = vand.u32 %v2091, 4294901760
        %v2093 = vsub.f32 %v2091, %v2092
        %v2094 = vand.u32 %v2093, 4294901760
        %2095 = vmatpush.msra.mxu0 %v2094
        %v2096 = vand.u32 %v785, 4294901760
        %v2097 = vsub.f32 %v785, %v2096
        %v2098 = vand.u32 %v2097, 4294901760
        %v2099 = vsub.f32 %v2097, %v2098
        %v2100 = vand.u32 %v2099, 4294901760
        %2101 = vmatpush.msra.mxu0 %v2100
        %v2102 = vand.u32 %v783, 4294901760
        %v2103 = vsub.f32 %v783, %v2102
        %v2104 = vand.u32 %v2103, 4294901760
        %v2105 = vsub.f32 %v2103, %v2104
        %v2106 = vand.u32 %v2105, 4294901760
        %2107 = vmatpush.msra.mxu0 %v2106
        %v2108 = vand.u32 %v766, 4294901760
        %2109 = vmatmul.f32.gmra.mxu0 %v2108
        %v2110 = vpop.f32.mrf.mxu0
        %v2111 = vadd.f32 %v2002, %v2110
        %v2112 = vand.u32 %v770, 4294901760
        %2113 = vmatmul.f32.gmra.mxu0 %v2112
        %v2114 = vpop.f32.mrf.mxu0
        %v2115 = vadd.f32 %v2010, %v2114
        %2116 = vdwg.mxu0
        %v2117 = vand.u32 %v813, 4294901760
        %v2118 = vsub.f32 %v813, %v2117
        %2119 = vmatpush.msra.mxu0 %v2118
        %v2120 = vand.u32 %v811, 4294901760
        %v2121 = vsub.f32 %v811, %v2120
        %2122 = vmatpush.msra.mxu0 %v2121
        %v2123 = vand.u32 %v809, 4294901760
        %v2124 = vsub.f32 %v809, %v2123
        %2125 = vmatpush.msra.mxu0 %v2124
        %v2126 = vand.u32 %v807, 4294901760
        %v2127 = vsub.f32 %v807, %v2126
        %2128 = vmatpush.msra.mxu0 %v2127
        %v2129 = vand.u32 %v805, 4294901760
        %v2130 = vsub.f32 %v805, %v2129
        %2131 = vmatpush.msra.mxu0 %v2130
        %v2132 = vand.u32 %v803, 4294901760
        %v2133 = vsub.f32 %v803, %v2132
        %2134 = vmatpush.msra.mxu0 %v2133
        %v2135 = vand.u32 %v801, 4294901760
        %v2136 = vsub.f32 %v801, %v2135
        %2137 = vmatpush.msra.mxu0 %v2136
        %v2138 = vand.u32 %v799, 4294901760
        %v2139 = vsub.f32 %v799, %v2138
        %2140 = vmatpush.msra.mxu0 %v2139
        %v2141 = vand.u32 %v797, 4294901760
        %v2142 = vsub.f32 %v797, %v2141
        %2143 = vmatpush.msra.mxu0 %v2142
        %v2144 = vand.u32 %v795, 4294901760
        %v2145 = vsub.f32 %v795, %v2144
        %2146 = vmatpush.msra.mxu0 %v2145
        %v2147 = vand.u32 %v793, 4294901760
        %v2148 = vsub.f32 %v793, %v2147
        %2149 = vmatpush.msra.mxu0 %v2148
        %v2150 = vand.u32 %v791, 4294901760
        %v2151 = vsub.f32 %v791, %v2150
        %2152 = vmatpush.msra.mxu0 %v2151
        %v2153 = vand.u32 %v789, 4294901760
        %v2154 = vsub.f32 %v789, %v2153
        %2155 = vmatpush.msra.mxu0 %v2154
        %v2156 = vand.u32 %v787, 4294901760
        %v2157 = vsub.f32 %v787, %v2156
        %2158 = vmatpush.msra.mxu0 %v2157
        %v2159 = vand.u32 %v785, 4294901760
        %v2160 = vsub.f32 %v785, %v2159
        %2161 = vmatpush.msra.mxu0 %v2160
        %v2162 = vand.u32 %v783, 4294901760
        %v2163 = vsub.f32 %v783, %v2162
        %2164 = vmatpush.msra.mxu0 %v2163
        %v2165 = vand.u32 %v766, 4294901760
        %v2166 = vsub.f32 %v766, %v2165
        %2167 = vmatmul.f32.gmra.mxu0 %v2166
        %v2168 = vpop.f32.mrf.mxu0
        %v2169 = vadd.f32 %v2111, %v2168
        %v2170 = vand.u32 %v770, 4294901760
        %v2171 = vsub.f32 %v770, %v2170
        %2172 = vmatmul.f32.gmra.mxu0 %v2171
        %v2173 = vpop.f32.mrf.mxu0
        %v2174 = vadd.f32 %v2115, %v2173
        %2175 = vdwg.mxu0
        %v2176 = vand.u32 %v813, 4294901760
        %2177 = vmatpush.msra.mxu0 %v2176
        %v2178 = vand.u32 %v811, 4294901760
        %2179 = vmatpush.msra.mxu0 %v2178
        %v2180 = vand.u32 %v809, 4294901760
        %2181 = vmatpush.msra.mxu0 %v2180
        %v2182 = vand.u32 %v807, 4294901760
        %2183 = vmatpush.msra.mxu0 %v2182
        %v2184 = vand.u32 %v805, 4294901760
        %2185 = vmatpush.msra.mxu0 %v2184
        %v2186 = vand.u32 %v803, 4294901760
        %2187 = vmatpush.msra.mxu0 %v2186
        %v2188 = vand.u32 %v801, 4294901760
        %2189 = vmatpush.msra.mxu0 %v2188
        %v2190 = vand.u32 %v799, 4294901760
        %2191 = vmatpush.msra.mxu0 %v2190
        %v2192 = vand.u32 %v797, 4294901760
        %2193 = vmatpush.msra.mxu0 %v2192
        %v2194 = vand.u32 %v795, 4294901760
        %2195 = vmatpush.msra.mxu0 %v2194
        %v2196 = vand.u32 %v793, 4294901760
        %2197 = vmatpush.msra.mxu0 %v2196
        %v2198 = vand.u32 %v791, 4294901760
        %2199 = vmatpush.msra.mxu0 %v2198
        %v2200 = vand.u32 %v789, 4294901760
        %2201 = vmatpush.msra.mxu0 %v2200
        %v2202 = vand.u32 %v787, 4294901760
        %2203 = vmatpush.msra.mxu0 %v2202
        %v2204 = vand.u32 %v785, 4294901760
        %2205 = vmatpush.msra.mxu0 %v2204
        %v2206 = vand.u32 %v783, 4294901760
        %2207 = vmatpush.msra.mxu0 %v2206
        %v2208 = vand.u32 %v766, 4294901760
        %v2209 = vsub.f32 %v766, %v2208
        %v2210 = vand.u32 %v2209, 4294901760
        %2211 = vmatmul.f32.gmra.mxu0 %v2210
        %v2212 = vpop.f32.mrf.mxu0
        %v2213 = vadd.f32 %v2169, %v2212
        %v2214 = vand.u32 %v770, 4294901760
        %v2215 = vsub.f32 %v770, %v2214
        %v2216 = vand.u32 %v2215, 4294901760
        %2217 = vmatmul.f32.gmra.mxu0 %v2216
        %v2218 = vpop.f32.mrf.mxu0
        %v2219 = vadd.f32 %v2174, %v2218
        %2220 = vdwg.mxu0
        %v2221 = vand.u32 %v813, 4294901760
        %v2222 = vsub.f32 %v813, %v2221
        %v2223 = vand.u32 %v2222, 4294901760
        %2224 = vmatpush.msra.mxu0 %v2223
        %v2225 = vand.u32 %v811, 4294901760
        %v2226 = vsub.f32 %v811, %v2225
        %v2227 = vand.u32 %v2226, 4294901760
        %2228 = vmatpush.msra.mxu0 %v2227
        %v2229 = vand.u32 %v809, 4294901760
        %v2230 = vsub.f32 %v809, %v2229
        %v2231 = vand.u32 %v2230, 4294901760
        %2232 = vmatpush.msra.mxu0 %v2231
        %v2233 = vand.u32 %v807, 4294901760
        %v2234 = vsub.f32 %v807, %v2233
        %v2235 = vand.u32 %v2234, 4294901760
        %2236 = vmatpush.msra.mxu0 %v2235
        %v2237 = vand.u32 %v805, 4294901760
        %v2238 = vsub.f32 %v805, %v2237
        %v2239 = vand.u32 %v2238, 4294901760
        %2240 = vmatpush.msra.mxu0 %v2239
        %v2241 = vand.u32 %v803, 4294901760
        %v2242 = vsub.f32 %v803, %v2241
        %v2243 = vand.u32 %v2242, 4294901760
        %2244 = vmatpush.msra.mxu0 %v2243
        %v2245 = vand.u32 %v801, 4294901760
        %v2246 = vsub.f32 %v801, %v2245
        %v2247 = vand.u32 %v2246, 4294901760
        %2248 = vmatpush.msra.mxu0 %v2247
        %v2249 = vand.u32 %v799, 4294901760
        %v2250 = vsub.f32 %v799, %v2249
        %v2251 = vand.u32 %v2250, 4294901760
        %2252 = vmatpush.msra.mxu0 %v2251
        %v2253 = vand.u32 %v797, 4294901760
        %v2254 = vsub.f32 %v797, %v2253
        %v2255 = vand.u32 %v2254, 4294901760
        %2256 = vmatpush.msra.mxu0 %v2255
        %v2257 = vand.u32 %v795, 4294901760
        %v2258 = vsub.f32 %v795, %v2257
        %v2259 = vand.u32 %v2258, 4294901760
        %2260 = vmatpush.msra.mxu0 %v2259
        %v2261 = vand.u32 %v793, 4294901760
        %v2262 = vsub.f32 %v793, %v2261
        %v2263 = vand.u32 %v2262, 4294901760
        %2264 = vmatpush.msra.mxu0 %v2263
        %v2265 = vand.u32 %v791, 4294901760
        %v2266 = vsub.f32 %v791, %v2265
        %v2267 = vand.u32 %v2266, 4294901760
        %2268 = vmatpush.msra.mxu0 %v2267
        %v2269 = vand.u32 %v789, 4294901760
        %v2270 = vsub.f32 %v789, %v2269
        %v2271 = vand.u32 %v2270, 4294901760
        %2272 = vmatpush.msra.mxu0 %v2271
        %v2273 = vand.u32 %v787, 4294901760
        %v2274 = vsub.f32 %v787, %v2273
        %v2275 = vand.u32 %v2274, 4294901760
        %2276 = vmatpush.msra.mxu0 %v2275
        %v2277 = vand.u32 %v785, 4294901760
        %v2278 = vsub.f32 %v785, %v2277
        %v2279 = vand.u32 %v2278, 4294901760
        %2280 = vmatpush.msra.mxu0 %v2279
        %v2281 = vand.u32 %v783, 4294901760
        %v2282 = vsub.f32 %v783, %v2281
        %v2283 = vand.u32 %v2282, 4294901760
        %2284 = vmatpush.msra.mxu0 %v2283
        %v2285 = vand.u32 %v766, 4294901760
        %2286 = vmatmul.f32.gmra.mxu0 %v2285
        %v2287 = vpop.f32.mrf.mxu0
        %v2288 = vadd.f32 %v2213, %v2287
        %v2289 = vand.u32 %v770, 4294901760
        %2290 = vmatmul.f32.gmra.mxu0 %v2289
        %v2291 = vpop.f32.mrf.mxu0
        %v2292 = vadd.f32 %v2219, %v2291
        %2293 = vdwg.mxu0
        %v2294 = vand.u32 %v813, 4294901760
        %2295 = vmatpush.msra.mxu0 %v2294
        %v2296 = vand.u32 %v811, 4294901760
        %2297 = vmatpush.msra.mxu0 %v2296
        %v2298 = vand.u32 %v809, 4294901760
        %2299 = vmatpush.msra.mxu0 %v2298
        %v2300 = vand.u32 %v807, 4294901760
        %2301 = vmatpush.msra.mxu0 %v2300
        %v2302 = vand.u32 %v805, 4294901760
        %2303 = vmatpush.msra.mxu0 %v2302
        %v2304 = vand.u32 %v803, 4294901760
        %2305 = vmatpush.msra.mxu0 %v2304
        %v2306 = vand.u32 %v801, 4294901760
        %2307 = vmatpush.msra.mxu0 %v2306
        %v2308 = vand.u32 %v799, 4294901760
        %2309 = vmatpush.msra.mxu0 %v2308
        %v2310 = vand.u32 %v797, 4294901760
        %2311 = vmatpush.msra.mxu0 %v2310
        %v2312 = vand.u32 %v795, 4294901760
        %2313 = vmatpush.msra.mxu0 %v2312
        %v2314 = vand.u32 %v793, 4294901760
        %2315 = vmatpush.msra.mxu0 %v2314
        %v2316 = vand.u32 %v791, 4294901760
        %2317 = vmatpush.msra.mxu0 %v2316
        %v2318 = vand.u32 %v789, 4294901760
        %2319 = vmatpush.msra.mxu0 %v2318
        %v2320 = vand.u32 %v787, 4294901760
        %2321 = vmatpush.msra.mxu0 %v2320
        %v2322 = vand.u32 %v785, 4294901760
        %2323 = vmatpush.msra.mxu0 %v2322
        %v2324 = vand.u32 %v783, 4294901760
        %2325 = vmatpush.msra.mxu0 %v2324
        %v2326 = vand.u32 %v766, 4294901760
        %2327 = vmatmul.f32.gmra.mxu0 %v2326
        %v2328 = vpop.f32.mrf.mxu0
        %v2329 = vadd.f32 %v2288, %v2328
        %v2330 = vand.u32 %v770, 4294901760
        %2331 = vmatmul.f32.gmra.mxu0 %v2330
        %v2332 = vpop.f32.mrf.mxu0
        %v2333 = vadd.f32 %v2292, %v2332
        %2334 = vdwg.mxu0
        %2336 = vset.pattern.permute.xlu0 0
        %2337 = vperm.xlu0 %2336, %v780
        %v2338 = vpop.permute.xlu0 %2337
        %2341 = vset.pattern.permute.xlu0 0
        %2342 = vperm.xlu0 %2341, %v781
        %v2343 = vpop.permute.xlu0 %2342
        %v2345 = vadd.f32 %v1957, %v2338
        %v2346 = vadd.f32 %v2329, %v2338
        %v2347 = vadd.f32 %v1961, %v2343
        %v2348 = vadd.f32 %v2333, %v2343
        %v2351 = vrot.slane %v2346, 4
        %vm2352 = vcmask 1043456
        %v2353 = vsel %vm2352, %v2345, %v2351
        %2355 = vst [vmem:[%s342] sm:$0xff] %v2353
        %v2358 = vrot.slane %v2348, 4
        %v2359 = vsel %vm2352, %v2347, %v2358
        %s2361 = scalar_lea.vmem %s342, 8 [#allocation10]
        %2362 = vst [vmem:[%s2361] sm:$0xff] %v2359
        %s2363 = sand.u32 %s169, 1
        %s2364 = scalar_lea.sflag [#allocation4], %s2363
        %s2365 = sand.u32 %s169, 1
        %s2366 = smul.addr %s2365, 16
        %s2367 = scalar_lea.vmem [#allocation10], %s2366
        // Predicated region
        $region57: #{tpu_custom_call.1} parent=39 // pred_check
          %p2368 = pneg %p179
        $region58: #{tpu_custom_call.1} parent=39 // pred_check_branch
          %2370 = sbr.rel (%p2368) target = $region60
        $region59: #{tpu_custom_call.1} parent=39 // pred_region
          %s2371 = smul.u32 2, %s31
          %2373 = vsyncadd %s2364, 0
          %s2374 = smul.addr %s30, 4
          %s2375 = sadd.s32 %s2371, %s2374
          %s2376 = smul.addr %s2375, 4
          %s2377 = scalar_lea.hbm %s5, %s2376
          %s2378 = sshll.u32 %s2367, 4
          %s2379 = int_to_ptr.vmem [resolvable:$true] %s2378
          %s2380 = sshll.u32 %s2377, 4
          %s2381 = int_to_ptr.hbm [resolvable:$true] %s2380
          %2386 = dma.vmem_to_hbm [thread:$0]  %s2379, 256, %s2381, %s2364, 128, 512, 8
        $region60: #{tpu_custom_call.1} parent=39 // pred_fallthru
          _
      $region40: #{tpu_custom_call.1} parent=5 // pred_fallthru
        _
      %p2387 = scmp.le.s32.totalorder 2, %s21
      // Predicated region
      $region61: #{tpu_custom_call.1} parent=5 // pred_check
        %p2388 = pneg %p2387
      $region62: #{tpu_custom_call.1} parent=5 // pred_check_branch
        %2390 = sbr.rel (%p2388) target = $region64
      $region63: #{tpu_custom_call.1} parent=5 // pred_region
        %s2391 = ssub.s32 %s21, 2
        // Predicated region
        $region65: #{tpu_custom_call.1} parent=63 // pred_check
          %p2392 = pneg %p185
        $region66: #{tpu_custom_call.1} parent=63 // pred_check_branch
          %2394 = sbr.rel (%p2392) target = $region68
        $region67: #{tpu_custom_call.1} parent=63 // pred_region
          %s2395 = sand.u32 %s170, 1
          %s2396 = scalar_lea.sflag [#allocation4], %s2395
          %s2397 = sand.u32 %s170, 1
          %s2398 = smul.addr %s2397, 16
          %s2399 = scalar_lea.vmem [#allocation10], %s2398
          %2401 = dma.done %s2396, 256
        $region68: #{tpu_custom_call.1} parent=63 // pred_fallthru
          _
      $region64: #{tpu_custom_call.1} parent=5 // pred_fallthru
        _
    $region6: #{tpu_custom_call.1} parent=1 // loop_footer
      %s25 = sadd.s32 1, %s21
    $region7: #{tpu_custom_call.1} parent=1 // loop_footer_branch
      %20 = sbr.rel target = $region3
    $region8: #{tpu_custom_call.1} parent=1 // loop_exit
      _
    %2402 = vsyncpa [#allocation3], 1
    %s2403 = scalar_lea.sflag [#allocation3], 1
    %2404 = vsyncpa %s2403, 1
    %2405 = vsyncpa [#allocation6], 1
    %s2406 = scalar_lea.sflag [#allocation6], 1
    %2407 = vsyncpa %s2406, 1
    %2408 = vsyncpa [#allocation9], 1
    %2409 = vsyncpa [#allocation4], 1
    %s2410 = scalar_lea.sflag [#allocation4], 1
    %2411 = vsyncpa %s2410, 1

</llo_original>
